<compile_context>
chip_gen: v5e
topology: v5e:2x2
jax: 0.10.0
libtpu: 0.0.40
codegen_flags: <defaults>
</compile_context>

<pallas_src>
import functools
import math

import jax
import jax.numpy as jnp
from jax import lax
from jax.experimental import pallas as pl
from jax.experimental.pallas import tpu as pltpu


# ------------------------------ Pallas kernel --------------------------------

def _conv3x3_relu_ps_kernel(x_ref, w_ref, b_ref, o_ref, *, r):
    # x_ref: (TH+2, W+2, Cin)   zero-padded input row tile (2-row / 2-col halo included)
    # w_ref: (9*Cin, Cout)      3x3 taps folded into K; columns ordered (i, j, c)
    # b_ref: (1, Cout)          bias in the same (i, j, c) column order
    # o_ref: (TH*r, W*r*C)      pixel-shuffled, lane-dense output rows
    thp, wdp, cin = x_ref.shape
    th, wd = thp - 2, wdp - 2
    cout = w_ref.shape[1]
    c = cout // (r * r)
    rc = r * c

    xt = x_ref[...]

    # im2col: ONE (TH*W, 9*Cin) patch matrix -> a single MXU matmul with K = 9*Cin
    # (column order is tap-major: kh, kw, cin — matching w_ref's row order).
    cols = []
    for kh in range(3):
        for kw in range(3):
            cols.append(xt[kh:kh + th, kw:kw + wd, :].reshape(th * wd, cin))
    patches = jnp.concatenate(cols, axis=-1)                       # (TH*W, 9*Cin)

    # NOTE: on v6e/v7x, casting patches / w_ref to bf16 here (f32 accumulate) hits the
    # full-rate MXU path; kept f32 to match the reference bit-for-bit at these sizes.
    acc = jnp.dot(patches, w_ref[...], preferred_element_type=jnp.float32)
    acc = acc + b_ref[0].astype(jnp.float32)                       # bias (hoisted, one add)
    acc = jnp.maximum(acc, 0.0)                                    # ReLU
    acc = acc.reshape(th, wd, cout)

    # Fused PixelShuffle epilogue (done on the VMEM tile, no extra HBM round trip):
    # columns are (i, j, c), so sub-pixel row i is the contiguous lane slab
    # [i*r*C, (i+1)*r*C), and (w, j, c) flattens into the lane axis in NHWC order.
    rows = [acc[:, :, i * rc:(i + 1) * rc].reshape(th, wd * rc) for i in range(r)]
    out = jnp.stack(rows, axis=1).reshape(th * r, wd * rc)         # rows ordered (h, i)
    o_ref[...] = out.astype(o_ref.dtype)


# ------------------------------ wrapper ---------------------------------------

def _pick_tile_rows(H, W, C, r, budget_bytes=20 * 1024 * 1024):
    """Largest row-tile TH that (a) divides H, (b) keeps the upscaled tile sublane
    aligned (TH*r % 8 == 0), (c) fits a conservative VMEM budget with double-buffered
    in/out tiles (v7x has only 64 MiB VMEM/TC), and (d) gives >= 2 tiles per image so
    the H axis can be pipelined / megacore-sharded (v7x has 2 TensorCores)."""
    cout = r * r * C

    def est(th):
        inp = (th + 2) * (W + 2) * C * 4
        outp = th * r * W * r * C * 4
        patches = th * W * 9 * C * 4
        acc = th * W * cout * 4
        return 2 * (inp + outp) + patches + acc

    divs = [d for d in range(1, H + 1) if H % d == 0]
    cands = [d for d in divs
             if d <= 64 and (d * r) % 8 == 0 and est(d) <= budget_bytes]
    multi = [d for d in cands if H // d >= 2]
    if multi:
        return max(multi)
    if cands:
        return max(cands)
    return H  # tiny images: fall back to a full-image block (always legal)


def _build_row_tiles(x_nhwc, th):
    """(N, H, W, C) -> zero-padded overlapping row tiles (N, H//th, th+2, W+2, C).

    pad + overlapping slices fuse into a single XLA pass over the small Cin-channel
    input; the kernel grid then tiles rows with a 2-row halo using plain Blocked specs.
    """
    N, H, W, C = x_nhwc.shape
    nT = H // th
    xp = jnp.pad(x_nhwc, ((0, 0), (1, 1), (1, 1), (0, 0)))
    tiles = [lax.slice_in_dim(xp, t * th, t * th + th + 2, axis=1) for t in range(nT)]
    return jnp.stack(tiles, axis=1)


@functools.partial(jax.jit, static_argnames=("r", "tile_rows"))
def conv3x3_relu_pixel_shuffle(x_nhwc, w, b, *, r, tile_rows=None):
    """PixelShuffle_r(ReLU(conv3x3_same(x, w) + b)) as one Pallas TPU kernel.

    x_nhwc: (N, H, W, C) f32
    w:      (3, 3, C, r*r*C) HWIO with PyTorch out-channel order (c, i, j)
    b:      (r*r*C,)
    returns (N, H*r, W*r, C)
    """
    N, H, W, C = x_nhwc.shape
    Cout = w.shape[-1]
    assert Cout == r * r * C, (Cout, r, C)
    th = tile_rows if tile_rows is not None else _pick_tile_rows(H, W, C, r)
    assert H % th == 0
    nT = H // th
    Wp = W + 2
    lane_out = W * r * C

    tiles = _build_row_tiles(x_nhwc, th)                   # (N, nT, th+2, Wp, C)

    # Fold the 3x3 taps into the contraction dim (K = 9*C) and permute output
    # columns from (c, i, j) -> (i, j, c) so the kernel epilogue can pixel-shuffle
    # with contiguous lane slabs. Tiny weights: done once per call in the wrapper.
    wk = w.reshape(3, 3, C, C, r, r)
    wk = jnp.transpose(wk, (0, 1, 2, 4, 5, 3)).reshape(9 * C, Cout)
    bk = jnp.transpose(b.reshape(C, r, r), (1, 2, 0)).reshape(1, Cout)

    out = pl.pallas_call(
        functools.partial(_conv3x3_relu_ps_kernel, r=r),
        out_shape=jax.ShapeDtypeStruct((N, H * r, lane_out), x_nhwc.dtype),
        grid_spec=pltpu.PrefetchScalarGridSpec(
            num_scalar_prefetch=0,
            grid=(N, nT),
            in_specs=[
                pl.BlockSpec((None, None, th + 2, Wp, C),
                             lambda n, t: (n, t, 0, 0, 0)),
                pl.BlockSpec((9 * C, Cout), lambda n, t: (0, 0)),
                pl.BlockSpec((1, Cout), lambda n, t: (0, 0)),
            ],
            out_specs=pl.BlockSpec((None, th * r, lane_out),
                                   lambda n, t: (n, t, 0)),
        ),
        compiler_params=pltpu.CompilerParams(
            dimension_semantics=("parallel", "parallel"),
            vmem_limit_bytes=48 * 1024 * 1024,
        ),
    )(tiles, wk, bk)

    # (N, H*r, W*r*C) -> (N, H*r, W*r, C): contiguous split of the lane dim, no copy.
    return out.reshape(N, H * r, W * r, C)


# ------------------------------ module glue ------------------------------------

def _init_conv(key, cin, cout):
    kw_key, kb_key = jax.random.split(key)
    w = 0.1 * jax.random.normal(kw_key, (3, 3, cin, cout), jnp.float32)
    b = 0.1 * jax.random.normal(kb_key, (cout,), jnp.float32)
    return w, b


def _make_upsample_params(key, n_channels, scale):
    """Parameters for _UpsampleBlock(n_channels, scale): list of (w, b, r)."""
    params = []
    if scale in (2, 4, 8):
        n_stages = int(math.log(scale, 2))
        keys = jax.random.split(key, n_stages)
        for k in keys:
            w, b = _init_conv(k, n_channels, 4 * n_channels)
            params.append((w, b, 2))
    elif scale == 3:
        w, b = _init_conv(key, n_channels, 9 * n_channels)
        params.append((w, b, 3))
    return params


def _upsample_forward(params, x_nhwc):
    out = x_nhwc
    for w, b, r in params:
        out = conv3x3_relu_pixel_shuffle(out, w, b, r=r)   # fully fused Pallas stage
    return out


class UpsampleBlockPallas:
    """JAX/Pallas equivalent of UpsampleBlock (groups=1)."""

    def __init__(self, n_channels, scale, multi_scale, key):
        self.multi_scale = multi_scale
        if multi_scale:
            k2, k3, k4 = jax.random.split(key, 3)
            self.up2 = _make_upsample_params(k2, n_channels, 2)
            self.up3 = _make_upsample_params(k3, n_channels, 3)
            self.up4 = _make_upsample_params(k4, n_channels, 4)
        else:
            self.up = _make_upsample_params(key, n_channels, scale)

    def __call__(self, x_nchw, scale):
        # NCHW -> NHWC for the kernel, back to NCHW for the caller (PyTorch layout).
        x = jnp.transpose(x_nchw, (0, 2, 3, 1))
        if self.multi_scale:
            if scale == 2:
                out = _upsample_forward(self.up2, x)
            elif scale == 3:
                out = _upsample_forward(self.up3, x)
            elif scale == 4:
                out = _upsample_forward(self.up4, x)
            else:
                raise NotImplementedError
        else:
            out = _upsample_forward(self.up, x)
        return jnp.transpose(out, (0, 3, 1, 2))


# ---------------------------- pure-JAX reference --------------------------------

def _ref_pixel_shuffle_nchw(x, r):
    N, C, H, W = x.shape
    Cn = C // (r * r)
    x = x.reshape(N, Cn, r, r, H, W)
    x = jnp.transpose(x, (0, 1, 4, 2, 5, 3))
    return x.reshape(N, Cn, H * r, W * r)


def _ref_forward(params, x_nchw):
    out = x_nchw
    for w, b, r in params:
        w_oihw = jnp.transpose(w, (3, 2, 0, 1))   # (Cout, Cin, 3, 3)
        out = lax.conv_general_dilated(
            out, w_oihw, window_strides=(1, 1), padding=((1, 1), (1, 1)),
            dimension_numbers=("NCHW", "OIHW", "NCHW"))
        out = out + b.reshape(1, -1, 1, 1)
        out = jnp.maximum(out, 0.0)
        out = _ref_pixel_shuffle_nchw(out, r)
    return out


# ------------------------------------ main --------------------------------------

if __name__ == "__main__":
    key = jax.random.PRNGKey(0)
    k_param, k_x = jax.random.split(key)

    n_channels = 4
    N, H, W = 2, 16, 16
    x = jax.random.normal(k_x, (N, n_channels, H, W), jnp.float32)  # NCHW

    block = UpsampleBlockPallas(n_channels, scale=2, multi_scale=True, key=k_param)

    ok = True
    for scale, params in ((2, block.up2), (3, block.up3), (4, block.up4)):
        out = block(x, scale)
        out = jax.block_until_ready(out)
        assert out.shape == (N, n_channels, H * scale, W * scale), out.shape
        ref = _ref_forward(params, x)
        ref = jax.block_until_ready(ref)
        if not jnp.allclose(out, ref, atol=1e-4, rtol=1e-4):
            ok = False
            print(f"MISMATCH at scale={scale}: "
                  f"max abs err = {float(jnp.max(jnp.abs(out - ref)))}")

    if ok:
        print("KERNEL_OK")
</pallas_src>

<mosaic_0001>
module attributes {stable_mosaic.version = 11 : i64} {
  func.func @_conv3x3_relu_ps_kernel(%arg0: i32, %arg1: i32, %arg2: memref<1x1x10x18x4xf32, #tpu.memory_space<vmem>>, %arg3: memref<36x16xf32, #tpu.memory_space<vmem>>, %arg4: memref<1x16xf32, #tpu.memory_space<vmem>>, %arg5: memref<1x16x128xf32, #tpu.memory_space<vmem>>) attributes {dimension_semantics = [#tpu.dimension_semantics<parallel>, #tpu.dimension_semantics<parallel>], iteration_bounds = array<i64: 2, 2>, scalar_prefetch = 0 : i64, scratch_operands = 0 : i64, tpu.core_type = #tpu.core_type<tc>, window_params = [{transform_indices = @transform_0, window_bounds = array<i64: 1, 1, 10, 18, 4>}, {pipeline_mode = #tpu.pipeline_mode<synchronous>, transform_indices = @transform_1, window_bounds = array<i64: 36, 16>}, {pipeline_mode = #tpu.pipeline_mode<synchronous>, transform_indices = @transform_2, window_bounds = array<i64: 1, 16>}, {transform_indices = @transform_3, window_bounds = array<i64: 1, 16, 128>}]} {
    %c0 = arith.constant 0 : index
    %c0_0 = arith.constant 0 : index
    %c0_1 = arith.constant 0 : index
    %c0_2 = arith.constant 0 : index
    %c0_3 = arith.constant 0 : index
    %0 = vector.load %arg2[%c0, %c0_0, %c0_1, %c0_2, %c0_3] : memref<1x1x10x18x4xf32, #tpu.memory_space<vmem>>, vector<1x1x10x18x4xf32>
    %1 = vector.shape_cast %0 : vector<1x1x10x18x4xf32> to vector<10x18x4xf32>
    %2 = vector.extract_strided_slice %1 {offsets = [0, 0, 0], sizes = [8, 16, 4], strides = [1, 1, 1]} : vector<10x18x4xf32> to vector<8x16x4xf32>
    %3 = vector.shape_cast %2 : vector<8x16x4xf32> to vector<128x4xf32>
    %4 = vector.extract_strided_slice %1 {offsets = [0, 1, 0], sizes = [8, 16, 4], strides = [1, 1, 1]} : vector<10x18x4xf32> to vector<8x16x4xf32>
    %5 = vector.shape_cast %4 : vector<8x16x4xf32> to vector<128x4xf32>
    %6 = vector.extract_strided_slice %1 {offsets = [0, 2, 0], sizes = [8, 16, 4], strides = [1, 1, 1]} : vector<10x18x4xf32> to vector<8x16x4xf32>
    %7 = vector.shape_cast %6 : vector<8x16x4xf32> to vector<128x4xf32>
    %8 = vector.extract_strided_slice %1 {offsets = [1, 0, 0], sizes = [8, 16, 4], strides = [1, 1, 1]} : vector<10x18x4xf32> to vector<8x16x4xf32>
    %9 = vector.shape_cast %8 : vector<8x16x4xf32> to vector<128x4xf32>
    %10 = vector.extract_strided_slice %1 {offsets = [1, 1, 0], sizes = [8, 16, 4], strides = [1, 1, 1]} : vector<10x18x4xf32> to vector<8x16x4xf32>
    %11 = vector.shape_cast %10 : vector<8x16x4xf32> to vector<128x4xf32>
    %12 = vector.extract_strided_slice %1 {offsets = [1, 2, 0], sizes = [8, 16, 4], strides = [1, 1, 1]} : vector<10x18x4xf32> to vector<8x16x4xf32>
    %13 = vector.shape_cast %12 : vector<8x16x4xf32> to vector<128x4xf32>
    %14 = vector.extract_strided_slice %1 {offsets = [2, 0, 0], sizes = [8, 16, 4], strides = [1, 1, 1]} : vector<10x18x4xf32> to vector<8x16x4xf32>
    %15 = vector.shape_cast %14 : vector<8x16x4xf32> to vector<128x4xf32>
    %16 = vector.extract_strided_slice %1 {offsets = [2, 1, 0], sizes = [8, 16, 4], strides = [1, 1, 1]} : vector<10x18x4xf32> to vector<8x16x4xf32>
    %17 = vector.shape_cast %16 : vector<8x16x4xf32> to vector<128x4xf32>
    %18 = vector.extract_strided_slice %1 {offsets = [2, 2, 0], sizes = [8, 16, 4], strides = [1, 1, 1]} : vector<10x18x4xf32> to vector<8x16x4xf32>
    %19 = vector.shape_cast %18 : vector<8x16x4xf32> to vector<128x4xf32>
    %20 = tpu.concatenate %3, %5, %7, %9, %11, %13, %15, %17, %19 in 1 : vector<128x4xf32>, vector<128x4xf32>, vector<128x4xf32>, vector<128x4xf32>, vector<128x4xf32>, vector<128x4xf32>, vector<128x4xf32>, vector<128x4xf32>, vector<128x4xf32> -> vector<128x36xf32>
    %c0_4 = arith.constant 0 : index
    %c0_5 = arith.constant 0 : index
    %21 = vector.load %arg3[%c0_4, %c0_5] : memref<36x16xf32, #tpu.memory_space<vmem>>, vector<36x16xf32>
    %cst = arith.constant dense<0.000000e+00> : vector<128x16xf32>
    %22 = tpu.matmul %20, %21, %cst {dimension_numbers = #tpu.dot_dimension_numbers<[1], [0], [0], [1], [0, 0, 1, 1], [], []>} : vector<128x36xf32>, vector<36x16xf32>, vector<128x16xf32> -> vector<128x16xf32>
    %c0_6 = arith.constant 0 : index
    %c0_7 = arith.constant 0 : index
    %23 = vector.load %arg4[%c0_6, %c0_7] : memref<1x16xf32, #tpu.memory_space<vmem>>, vector<1x16xf32>
    %24 = vector.shape_cast %23 : vector<1x16xf32> to vector<16xf32>
    %25 = vector.shape_cast %24 : vector<16xf32> to vector<1x16xf32>
    %26 = vector.broadcast %25 : vector<1x16xf32> to vector<128x16xf32>
    %27 = arith.addf %22, %26 : vector<128x16xf32>
    %cst_8 = arith.constant 0.000000e+00 : f32
    %28 = vector.broadcast %cst_8 : f32 to vector<128x16xf32>
    %29 = arith.maximumf %27, %28 : vector<128x16xf32>
    %30 = vector.shape_cast %29 : vector<128x16xf32> to vector<8x16x16xf32>
    %31 = vector.extract_strided_slice %30 {offsets = [0, 0, 0], sizes = [8, 16, 8], strides = [1, 1, 1]} : vector<8x16x16xf32> to vector<8x16x8xf32>
    %32 = vector.shape_cast %31 : vector<8x16x8xf32> to vector<8x128xf32>
    %33 = vector.extract_strided_slice %30 {offsets = [0, 0, 8], sizes = [8, 16, 8], strides = [1, 1, 1]} : vector<8x16x16xf32> to vector<8x16x8xf32>
    %34 = vector.shape_cast %33 : vector<8x16x8xf32> to vector<8x128xf32>
    %35 = vector.shape_cast %32 : vector<8x128xf32> to vector<8x1x128xf32>
    %36 = vector.shape_cast %34 : vector<8x128xf32> to vector<8x1x128xf32>
    %37 = tpu.concatenate %35, %36 in 1 : vector<8x1x128xf32>, vector<8x1x128xf32> -> vector<8x2x128xf32>
    %38 = vector.shape_cast %37 : vector<8x2x128xf32> to vector<16x128xf32>
    %c0_9 = arith.constant 0 : index
    %c0_10 = arith.constant 0 : index
    %c0_11 = arith.constant 0 : index
    %39 = vector.load %arg5[%c0_9, %c0_10, %c0_11] : memref<1x16x128xf32, #tpu.memory_space<vmem>>, vector<1x16x128xf32>
    %40 = vector.shape_cast %39 : vector<1x16x128xf32> to vector<16x128xf32>
    %41 = vector.shape_cast %38 : vector<16x128xf32> to vector<1x16x128xf32>
    tpu.vector_store %arg5[%c0_9, %c0_10, %c0_11], %41 {strides = array<i32>} : memref<1x16x128xf32, #tpu.memory_space<vmem>>, vector<1x16x128xf32>,
    return
  }
  func.func @transform_0(%arg0: i32, %arg1: i32) -> (i32, i32, i32, i32, i32) {
    %c0_i32 = arith.constant 0 : i32
    %c0_i32_0 = arith.constant 0 : i32
    %c0_i32_1 = arith.constant 0 : i32
    %c0_i32_2 = arith.constant 0 : i32
    return %arg0, %arg1, %c0_i32, %c0_i32_0, %c0_i32_1 : i32, i32, i32, i32, i32
  }
  func.func @transform_1(%arg0: i32, %arg1: i32) -> (i32, i32) {
    %c0_i32 = arith.constant 0 : i32
    %c0_i32_0 = arith.constant 0 : i32
    %c0_i32_1 = arith.constant 0 : i32
    return %c0_i32, %c0_i32_0 : i32, i32
  }
  func.func @transform_2(%arg0: i32, %arg1: i32) -> (i32, i32) {
    %c0_i32 = arith.constant 0 : i32
    %c0_i32_0 = arith.constant 0 : i32
    %c0_i32_1 = arith.constant 0 : i32
    return %c0_i32, %c0_i32_0 : i32, i32
  }
  func.func @transform_3(%arg0: i32, %arg1: i32) -> (i32, i32, i32) {
    %c0_i32 = arith.constant 0 : i32
    %c0_i32_0 = arith.constant 0 : i32
    return %arg0, %arg1, %c0_i32 : i32, i32, i32
  }
}

</mosaic_0001>

<llo_original>
// kernel: conv3x3_relu_pixel_shuffle.1
$region0: #{conv3x3_relu_pixel_shuffle.1}
  #allocation0 [shape = 'u32[]', space=smem, size = 0x4, offset = 0x4, fixed_abs, tag = 'smem constant byte address 0x4 - core index']
  #allocation1 [shape = 'u32[72,128]{1,0:T(1,128)}', space=vmem, size = 0x9000, scoped, tag = 'internal scratch']
  %s0 = inlined_call_operand.vmem [shape: f32[2,2,10,18,4], index: 0, kind: input, shape index: {}]
  %s1 = inlined_call_operand.vmem [shape: f32[36,16], index: 1, kind: input, shape index: {}]
  %s2 = inlined_call_operand.vmem [shape: f32[1,16], index: 2, kind: input, shape index: {}]
  %s3 = inlined_call_operand.vmem [shape: f32[2,32,128], index: 3, kind: output, shape index: {}]
  %s4 = sld [smem:[#allocation0]]
  $region45: #{conv3x3_relu_pixel_shuffle.1} parent=0
    _
  %s6 = ssub.s32 1, %s4
  %s7 = scalar_select 0, %s6, %s4
  loop: start=0, step=1, limit=6
  $region2: #{conv3x3_relu_pixel_shuffle.1} parent=0 // loop_pre_header
    _
  $region3: #{conv3x3_relu_pixel_shuffle.1} parent=0 // loop_header
    %s9 = sphi 0, %s13
    %p10 = scmp.ge.s32.totalorder %s9, 6
    %s16 = sphi 0, %s28
    %s17 = sphi 0, %s24
    %s18 = sphi 0, %s16
    %s19 = sphi 0, %s17
    %s20 = sphi 0, %s18
    %s21 = sphi 0, %s19
    %s33 = sphi 0, %s35
    %s36 = sphi 0, %s33
    %s37 = sphi 0, %s36
    %s53 = sphi 0, %s37
    %s57 = sphi 0, %s57
    %s59 = sphi 0, %s57
    %s60 = sphi 0, %s59
    %s74 = sphi 0, %s60
    %s78 = sphi 0, %s78
    %s80 = sphi 0, %s78
    %s81 = sphi 0, %s80
    %s95 = sphi 0, %s81
    %s103 = sphi 0, %s105
    %s106 = sphi 0, %s103
    %s107 = sphi 0, %s106
    %s123 = sphi 0, %s107
  $region4: #{conv3x3_relu_pixel_shuffle.1} parent=0 // loop_header_branch
    %12 = sbr.rel (%p10) target = $region8
  $region5: #{conv3x3_relu_pixel_shuffle.1} parent=0 // loop_body
    %s14 = ssub.s32 %s9, 1
    %s15 = ssub.s32 %s9, 2
    %s22 = sadd.s32 1, %s17
    %p23 = scmp.ge.s32.totalorder %s22, 2
    %s24 = scalar_select %p23, 0, %s22
    %s25 = sadd.s32 1, %s16
    %s26 = scalar_select %p23, %s25, %s16
    %p27 = scmp.ge.s32.totalorder %s26, 2
    %s28 = scalar_select %p27, 0, %s26
    %s29 = ssub.s32 %s16, %s28
    %s30 = ssub.s32 %s17, %s24
    %s31 = sor.u32 %s29, %s30
    %p32 = scmp.eq.s32.totalorder %s31, 0
    %s34 = sadd.s32 %s33, 1
    %s35 = scalar_select %p32, %s33, %s34
    %p38 = pneg %p32
    %p39 = scmp.eq.s32.totalorder %s9, 3
    %p40 = por %p38, %p39
    %p41 = scmp.ne.s32.totalorder %s33, %s36
    %p42 = scmp.eq.s32.totalorder %s9, 0
    %p43 = por %p41, %p42
    %p44 = scmp.ne.s32.totalorder %s33, %s36
    %p45 = scmp.eq.s32.totalorder %s14, 3
    %p46 = por %p44, %p45
    %p47 = scmp.ne.s32.totalorder %s36, %s37
    %p48 = scmp.eq.s32.totalorder %s14, 0
    %p49 = por %p47, %p48
    %p50 = scmp.ne.s32.totalorder %s36, %s37
    %p51 = scmp.eq.s32.totalorder %s15, 3
    %p52 = por %p50, %p51
    %p54 = scmp.ne.s32.totalorder %s37, %s53
    %p55 = scmp.eq.s32.totalorder %s15, 0
    %p56 = por %p54, %p55
    %s58 = sadd.s32 %s57, 1
    %p61 = scmp.eq.s32.totalorder %s9, 3
    %p62 = scmp.ne.s32.totalorder %s57, %s59
    %p63 = scmp.eq.s32.totalorder %s9, 0
    %p64 = por %p62, %p63
    %p65 = scmp.ne.s32.totalorder %s57, %s59
    %p66 = scmp.eq.s32.totalorder %s14, 3
    %p67 = por %p65, %p66
    %p68 = scmp.ne.s32.totalorder %s59, %s60
    %p69 = scmp.eq.s32.totalorder %s14, 0
    %p70 = por %p68, %p69
    %p71 = scmp.ne.s32.totalorder %s59, %s60
    %p72 = scmp.eq.s32.totalorder %s15, 3
    %p73 = por %p71, %p72
    %p75 = scmp.ne.s32.totalorder %s60, %s74
    %p76 = scmp.eq.s32.totalorder %s15, 0
    %p77 = por %p75, %p76
    %s79 = sadd.s32 %s78, 1
    %p82 = scmp.eq.s32.totalorder %s9, 3
    %p83 = scmp.ne.s32.totalorder %s78, %s80
    %p84 = scmp.eq.s32.totalorder %s9, 0
    %p85 = por %p83, %p84
    %p86 = scmp.ne.s32.totalorder %s78, %s80
    %p87 = scmp.eq.s32.totalorder %s14, 3
    %p88 = por %p86, %p87
    %p89 = scmp.ne.s32.totalorder %s80, %s81
    %p90 = scmp.eq.s32.totalorder %s14, 0
    %p91 = por %p89, %p90
    %p92 = scmp.ne.s32.totalorder %s80, %s81
    %p93 = scmp.eq.s32.totalorder %s15, 3
    %p94 = por %p92, %p93
    %p96 = scmp.ne.s32.totalorder %s81, %s95
    %p97 = scmp.eq.s32.totalorder %s15, 0
    %p98 = por %p96, %p97
    %s99 = ssub.s32 %s16, %s28
    %s100 = ssub.s32 %s17, %s24
    %s101 = sor.u32 %s99, %s100
    %p102 = scmp.eq.s32.totalorder %s101, 0
    %s104 = sadd.s32 %s103, 1
    %s105 = scalar_select %p102, %s103, %s104
    %p108 = pneg %p102
    %p109 = scmp.eq.s32.totalorder %s9, 3
    %p110 = por %p108, %p109
    %p111 = scmp.ne.s32.totalorder %s103, %s106
    %p112 = scmp.eq.s32.totalorder %s9, 0
    %p113 = por %p111, %p112
    %p114 = scmp.ne.s32.totalorder %s103, %s106
    %p115 = scmp.eq.s32.totalorder %s14, 3
    %p116 = por %p114, %p115
    %p117 = scmp.ne.s32.totalorder %s106, %s107
    %p118 = scmp.eq.s32.totalorder %s14, 0
    %p119 = por %p117, %p118
    %p120 = scmp.ne.s32.totalorder %s106, %s107
    %p121 = scmp.eq.s32.totalorder %s15, 3
    %p122 = por %p120, %p121
    %p124 = scmp.ne.s32.totalorder %s107, %s123
    %p125 = scmp.eq.s32.totalorder %s15, 0
    %p126 = por %p124, %p125
    %p127 = scmp.le.s32.totalorder 1, %s9
    %p128 = scmp.lt.s32.totalorder %s9, 5
    %p129 = pnand %p127, %p128
    %p130 = pneg %p129
    // Predicated region
    $region9: #{conv3x3_relu_pixel_shuffle.1} parent=5 // pred_check
      _
    $region10: #{conv3x3_relu_pixel_shuffle.1} parent=5 // pred_check_branch
      %132 = sbr.rel (%p129) target = $region12
    $region11: #{conv3x3_relu_pixel_shuffle.1} parent=5 // pred_region
      %s133 = ssub.s32 %s9, 1
      // Predicated region
      $region13: #{conv3x3_relu_pixel_shuffle.1} parent=11 // pred_check
        %p134 = pneg %p70
      $region14: #{conv3x3_relu_pixel_shuffle.1} parent=11 // pred_check_branch
        %136 = sbr.rel (%p134) target = $region16
      $region15: #{conv3x3_relu_pixel_shuffle.1} parent=11 // pred_region
        _
      $region16: #{conv3x3_relu_pixel_shuffle.1} parent=11 // pred_fallthru
        _
      // Predicated region
      $region17: #{conv3x3_relu_pixel_shuffle.1} parent=11 // pred_check
        %p137 = pneg %p91
      $region18: #{conv3x3_relu_pixel_shuffle.1} parent=11 // pred_check_branch
        %139 = sbr.rel (%p137) target = $region20
      $region19: #{conv3x3_relu_pixel_shuffle.1} parent=11 // pred_region
        _
      $region20: #{conv3x3_relu_pixel_shuffle.1} parent=11 // pred_fallthru
        _
    $region12: #{conv3x3_relu_pixel_shuffle.1} parent=5 // pred_fallthru
      _
    %p140 = scmp.lt.s32.totalorder %s9, 4
    // Predicated region
    $region21: #{conv3x3_relu_pixel_shuffle.1} parent=5 // pred_check
      %p141 = pneg %p140
    $region22: #{conv3x3_relu_pixel_shuffle.1} parent=5 // pred_check_branch
      %143 = sbr.rel (%p141) target = $region24
    $region23: #{conv3x3_relu_pixel_shuffle.1} parent=5 // pred_region
      // Predicated region
      $region25: #{conv3x3_relu_pixel_shuffle.1} parent=23 // pred_check
        %p144 = pneg %p43
      $region26: #{conv3x3_relu_pixel_shuffle.1} parent=23 // pred_check_branch
        %146 = sbr.rel (%p144) target = $region28
      $region27: #{conv3x3_relu_pixel_shuffle.1} parent=23 // pred_region
        %p147 = scmp.lt.s32.totalorder %s16, 1
        %s148 = scalar_select %p147, %s16, 1
        %p149 = scmp.lt.s32.totalorder %s17, 1
        %s150 = scalar_select %p149, %s17, 1
        %s151 = smul.addr %s150, 30
        %s152 = smul.addr %s148, 60
        %s153 = sadd.s32 %s151, %s152
        %s154 = smul.addr %s153, 8
        %s155 = scalar_lea.vmem %s0, %s154
      $region28: #{conv3x3_relu_pixel_shuffle.1} parent=23 // pred_fallthru
        _
    $region24: #{conv3x3_relu_pixel_shuffle.1} parent=5 // pred_fallthru
      _
    %p156 = scmp.le.s32.totalorder 1, %s9
    %p157 = scmp.lt.s32.totalorder %s9, 5
    %p158 = pnand %p156, %p157
    %p159 = pneg %p158
    // Predicated region
    $region29: #{conv3x3_relu_pixel_shuffle.1} parent=5 // pred_check
      _
    $region30: #{conv3x3_relu_pixel_shuffle.1} parent=5 // pred_check_branch
      %161 = sbr.rel (%p158) target = $region32
    $region31: #{conv3x3_relu_pixel_shuffle.1} parent=5 // pred_region
      %s162 = ssub.s32 %s9, 1
      %p163 = scmp.lt.s32.totalorder %s18, 1
      %s164 = scalar_select %p163, %s18, 1
      %p165 = scmp.lt.s32.totalorder %s19, 1
      %s166 = scalar_select %p165, %s19, 1
      %s167 = smul.addr %s166, 30
      %s168 = smul.addr %s164, 60
      %s169 = sadd.s32 %s167, %s168
      %s170 = smul.addr %s169, 8
      %s171 = scalar_lea.vmem %s0, %s170
      %p172 = pneg %p49
      %p173 = pneg %p46
      %p174 = pneg %p70
      %p175 = pneg %p67
      %p176 = pneg %p91
      %p177 = pneg %p88
      %p178 = pneg %p119
      %p179 = pneg %p116
      %s180 = smul.u32 2, %s19
      %p181 = scmp.lt.s32.totalorder %s18, 1
      %s182 = scalar_select %p181, %s18, 1
      %p183 = scmp.lt.s32.totalorder %s180, 3
      %s184 = scalar_select %p183, %s180, 3
      %s185 = smul.addr %s182, 4
      %s186 = sadd.s32 %s184, %s185
      %s187 = smul.addr %s186, 8
      %s188 = scalar_lea.vmem %s3, %s187
      %p189 = scmp.lt.s32.totalorder %s18, 1
      %s190 = scalar_select %p189, %s18, 1
      %p191 = scmp.lt.s32.totalorder %s19, 1
      %s192 = scalar_select %p191, %s19, 1
      %s193 = smul.addr %s192, 30
      %s194 = smul.addr %s190, 60
      %s195 = sadd.s32 %s193, %s194
      %s196 = smul.addr %s195, 8
      %s197 = scalar_lea.vmem %s0, %s196
      %s198 = smul.u32 2, %s19
      %p199 = scmp.lt.s32.totalorder %s18, 1
      %s200 = scalar_select %p199, %s18, 1
      %p201 = scmp.lt.s32.totalorder %s198, 3
      %s202 = scalar_select %p201, %s198, 3
      %s203 = smul.addr %s200, 4
      %s204 = sadd.s32 %s202, %s203
      %s205 = smul.addr %s204, 8
      %s206 = scalar_lea.vmem %s3, %s205
      %s207 = smul.u32 2, %s19
      %v208 = vld [vmem:[%s197] sm:$0xff]
      %v209 = vld [vmem:[%s197 + $0x8] sm:$0xff]
      %v210 = vld [vmem:[%s197 + $0x10] sm:$0x3]
      %v211 = vld [vmem:[%s197 + $0x18] sm:$0xff]
      %v212 = vld [vmem:[%s197 + $0x20] sm:$0xff]
      %v213 = vld [vmem:[%s197 + $0x28] sm:$0x3]
      %v214 = vld [vmem:[%s197 + $0x30] sm:$0xff]
      %v215 = vld [vmem:[%s197 + $0x38] sm:$0xff]
      %v216 = vld [vmem:[%s197 + $0x40] sm:$0x3]
      %v217 = vld [vmem:[%s197 + $0x48] sm:$0xff]
      %v218 = vld [vmem:[%s197 + $0x50] sm:$0xff]
      %v219 = vld [vmem:[%s197 + $0x58] sm:$0x3]
      %v220 = vld [vmem:[%s197 + $0x60] sm:$0xff]
      %v221 = vld [vmem:[%s197 + $0x68] sm:$0xff]
      %v222 = vld [vmem:[%s197 + $0x70] sm:$0x3]
      %v223 = vld [vmem:[%s197 + $0x78] sm:$0xff]
      %v224 = vld [vmem:[%s197 + $0x80] sm:$0xff]
      %v225 = vld [vmem:[%s197 + $0x88] sm:$0x3]
      %v226 = vld [vmem:[%s197 + $0x90] sm:$0xff]
      %v227 = vld [vmem:[%s197 + $0x98] sm:$0xff]
      %v228 = vld [vmem:[%s197 + $0xa0] sm:$0x3]
      %v229 = vld [vmem:[%s197 + $0xa8] sm:$0xff]
      %v230 = vld [vmem:[%s197 + $0xb0] sm:$0xff]
      %v231 = vld [vmem:[%s197 + $0xb8] sm:$0x3]
      %v232 = vld [vmem:[%s197 + $0xc0] sm:$0xff]
      %v233 = vld [vmem:[%s197 + $0xc8] sm:$0xff]
      %v234 = vld [vmem:[%s197 + $0xd0] sm:$0x3]
      %v235 = vld [vmem:[%s197 + $0xd8] sm:$0xff]
      %v236 = vld [vmem:[%s197 + $0xe0] sm:$0xff]
      %v237 = vld [vmem:[%s197 + $0xe8] sm:$0x3]
      %vm262 = vcmask 1046528
      %v263 = vrot.slane %v208, 1
      %v264 = vrot.slane %v209, 1
      %v265 = vsel %vm262, %v263, %v264
      %v266 = vrot.slane %v210, 1
      %v267 = vsel %vm262, %v264, %v266
      %v268 = vrot.slane %v211, 1
      %v269 = vrot.slane %v212, 1
      %v270 = vsel %vm262, %v268, %v269
      %v271 = vrot.slane %v213, 1
      %v272 = vsel %vm262, %v269, %v271
      %v273 = vrot.slane %v214, 1
      %v274 = vrot.slane %v215, 1
      %v275 = vsel %vm262, %v273, %v274
      %v276 = vrot.slane %v216, 1
      %v277 = vsel %vm262, %v274, %v276
      %v278 = vrot.slane %v217, 1
      %v279 = vrot.slane %v218, 1
      %v280 = vsel %vm262, %v278, %v279
      %v281 = vrot.slane %v219, 1
      %v282 = vsel %vm262, %v279, %v281
      %v283 = vrot.slane %v220, 1
      %v284 = vrot.slane %v221, 1
      %v285 = vsel %vm262, %v283, %v284
      %v286 = vrot.slane %v222, 1
      %v287 = vsel %vm262, %v284, %v286
      %v288 = vrot.slane %v223, 1
      %v289 = vrot.slane %v224, 1
      %v290 = vsel %vm262, %v288, %v289
      %v291 = vrot.slane %v225, 1
      %v292 = vsel %vm262, %v289, %v291
      %v293 = vrot.slane %v226, 1
      %v294 = vrot.slane %v227, 1
      %v295 = vsel %vm262, %v293, %v294
      %v296 = vrot.slane %v228, 1
      %v297 = vsel %vm262, %v294, %v296
      %v298 = vrot.slane %v229, 1
      %v299 = vrot.slane %v230, 1
      %v300 = vsel %vm262, %v298, %v299
      %v301 = vrot.slane %v231, 1
      %v302 = vsel %vm262, %v299, %v301
      %vm303 = vcmask 1045504
      %v304 = vrot.slane %v208, 2
      %v305 = vrot.slane %v209, 2
      %v306 = vsel %vm303, %v304, %v305
      %v307 = vrot.slane %v210, 2
      %v308 = vsel %vm303, %v305, %v307
      %v309 = vrot.slane %v211, 2
      %v310 = vrot.slane %v212, 2
      %v311 = vsel %vm303, %v309, %v310
      %v312 = vrot.slane %v213, 2
      %v313 = vsel %vm303, %v310, %v312
      %v314 = vrot.slane %v214, 2
      %v315 = vrot.slane %v215, 2
      %v316 = vsel %vm303, %v314, %v315
      %v317 = vrot.slane %v216, 2
      %v318 = vsel %vm303, %v315, %v317
      %v319 = vrot.slane %v217, 2
      %v320 = vrot.slane %v218, 2
      %v321 = vsel %vm303, %v319, %v320
      %v322 = vrot.slane %v219, 2
      %v323 = vsel %vm303, %v320, %v322
      %v324 = vrot.slane %v220, 2
      %v325 = vrot.slane %v221, 2
      %v326 = vsel %vm303, %v324, %v325
      %v327 = vrot.slane %v222, 2
      %v328 = vsel %vm303, %v325, %v327
      %v329 = vrot.slane %v223, 2
      %v330 = vrot.slane %v224, 2
      %v331 = vsel %vm303, %v329, %v330
      %v332 = vrot.slane %v225, 2
      %v333 = vsel %vm303, %v330, %v332
      %v334 = vrot.slane %v226, 2
      %v335 = vrot.slane %v227, 2
      %v336 = vsel %vm303, %v334, %v335
      %v337 = vrot.slane %v228, 2
      %v338 = vsel %vm303, %v335, %v337
      %v339 = vrot.slane %v229, 2
      %v340 = vrot.slane %v230, 2
      %v341 = vsel %vm303, %v339, %v340
      %v342 = vrot.slane %v231, 2
      %v343 = vsel %vm303, %v340, %v342
      %v347 = vrot.slane %v232, 1
      %v348 = vrot.slane %v233, 1
      %v349 = vsel %vm262, %v347, %v348
      %v350 = vrot.slane %v234, 1
      %v351 = vsel %vm262, %v348, %v350
      %v352 = vrot.slane %v232, 2
      %v353 = vrot.slane %v233, 2
      %v354 = vsel %vm303, %v352, %v353
      %v355 = vrot.slane %v234, 2
      %v356 = vsel %vm303, %v353, %v355
      %v360 = vrot.slane %v235, 1
      %v361 = vrot.slane %v236, 1
      %v362 = vsel %vm262, %v360, %v361
      %v363 = vrot.slane %v237, 1
      %v364 = vsel %vm262, %v361, %v363
      %v365 = vrot.slane %v235, 2
      %v366 = vrot.slane %v236, 2
      %v367 = vsel %vm303, %v365, %v366
      %v368 = vrot.slane %v237, 2
      %v369 = vsel %vm303, %v366, %v368
      %370 = vrot.lane.b32.xlu0 %v265, 4
      %v371 = vpop.permute.xlu0 %370
      %372 = vrot.lane.b32.xlu0 %v267, 4
      %v373 = vpop.permute.xlu0 %372
      %374 = vrot.lane.b32.xlu0 %v270, 4
      %v375 = vpop.permute.xlu0 %374
      %376 = vrot.lane.b32.xlu0 %v272, 4
      %v377 = vpop.permute.xlu0 %376
      %378 = vrot.lane.b32.xlu0 %v275, 4
      %v379 = vpop.permute.xlu0 %378
      %380 = vrot.lane.b32.xlu0 %v277, 4
      %v381 = vpop.permute.xlu0 %380
      %382 = vrot.lane.b32.xlu0 %v280, 4
      %v383 = vpop.permute.xlu0 %382
      %384 = vrot.lane.b32.xlu0 %v282, 4
      %v385 = vpop.permute.xlu0 %384
      %386 = vrot.lane.b32.xlu0 %v285, 4
      %v387 = vpop.permute.xlu0 %386
      %388 = vrot.lane.b32.xlu0 %v287, 4
      %v389 = vpop.permute.xlu0 %388
      %390 = vrot.lane.b32.xlu0 %v290, 4
      %v391 = vpop.permute.xlu0 %390
      %392 = vrot.lane.b32.xlu0 %v292, 4
      %v393 = vpop.permute.xlu0 %392
      %394 = vrot.lane.b32.xlu0 %v295, 4
      %v395 = vpop.permute.xlu0 %394
      %396 = vrot.lane.b32.xlu0 %v297, 4
      %v397 = vpop.permute.xlu0 %396
      %398 = vrot.lane.b32.xlu0 %v300, 4
      %v399 = vpop.permute.xlu0 %398
      %400 = vrot.lane.b32.xlu0 %v302, 4
      %v401 = vpop.permute.xlu0 %400
      %418 = vrot.lane.b32.xlu0 %v306, 8
      %v419 = vpop.permute.xlu0 %418
      %420 = vrot.lane.b32.xlu0 %v308, 8
      %v421 = vpop.permute.xlu0 %420
      %422 = vrot.lane.b32.xlu0 %v311, 8
      %v423 = vpop.permute.xlu0 %422
      %424 = vrot.lane.b32.xlu0 %v313, 8
      %v425 = vpop.permute.xlu0 %424
      %426 = vrot.lane.b32.xlu0 %v316, 8
      %v427 = vpop.permute.xlu0 %426
      %428 = vrot.lane.b32.xlu0 %v318, 8
      %v429 = vpop.permute.xlu0 %428
      %430 = vrot.lane.b32.xlu0 %v321, 8
      %v431 = vpop.permute.xlu0 %430
      %432 = vrot.lane.b32.xlu0 %v323, 8
      %v433 = vpop.permute.xlu0 %432
      %434 = vrot.lane.b32.xlu0 %v326, 8
      %v435 = vpop.permute.xlu0 %434
      %436 = vrot.lane.b32.xlu0 %v328, 8
      %v437 = vpop.permute.xlu0 %436
      %438 = vrot.lane.b32.xlu0 %v331, 8
      %v439 = vpop.permute.xlu0 %438
      %440 = vrot.lane.b32.xlu0 %v333, 8
      %v441 = vpop.permute.xlu0 %440
      %442 = vrot.lane.b32.xlu0 %v336, 8
      %v443 = vpop.permute.xlu0 %442
      %444 = vrot.lane.b32.xlu0 %v338, 8
      %v445 = vpop.permute.xlu0 %444
      %446 = vrot.lane.b32.xlu0 %v341, 8
      %v447 = vpop.permute.xlu0 %446
      %448 = vrot.lane.b32.xlu0 %v343, 8
      %v449 = vpop.permute.xlu0 %448
      %466 = vrot.lane.b32.xlu0 %v211, 12
      %v467 = vpop.permute.xlu0 %466
      %468 = vrot.lane.b32.xlu0 %v212, 12
      %v469 = vpop.permute.xlu0 %468
      %470 = vrot.lane.b32.xlu0 %v214, 12
      %v471 = vpop.permute.xlu0 %470
      %472 = vrot.lane.b32.xlu0 %v215, 12
      %v473 = vpop.permute.xlu0 %472
      %474 = vrot.lane.b32.xlu0 %v217, 12
      %v475 = vpop.permute.xlu0 %474
      %476 = vrot.lane.b32.xlu0 %v218, 12
      %v477 = vpop.permute.xlu0 %476
      %478 = vrot.lane.b32.xlu0 %v220, 12
      %v479 = vpop.permute.xlu0 %478
      %480 = vrot.lane.b32.xlu0 %v221, 12
      %v481 = vpop.permute.xlu0 %480
      %482 = vrot.lane.b32.xlu0 %v223, 12
      %v483 = vpop.permute.xlu0 %482
      %484 = vrot.lane.b32.xlu0 %v224, 12
      %v485 = vpop.permute.xlu0 %484
      %486 = vrot.lane.b32.xlu0 %v226, 12
      %v487 = vpop.permute.xlu0 %486
      %488 = vrot.lane.b32.xlu0 %v227, 12
      %v489 = vpop.permute.xlu0 %488
      %490 = vrot.lane.b32.xlu0 %v229, 12
      %v491 = vpop.permute.xlu0 %490
      %492 = vrot.lane.b32.xlu0 %v230, 12
      %v493 = vpop.permute.xlu0 %492
      %494 = vrot.lane.b32.xlu0 %v232, 12
      %v495 = vpop.permute.xlu0 %494
      %496 = vrot.lane.b32.xlu0 %v233, 12
      %v497 = vpop.permute.xlu0 %496
      %514 = vrot.lane.b32.xlu0 %v270, 16
      %v515 = vpop.permute.xlu0 %514
      %516 = vrot.lane.b32.xlu0 %v272, 16
      %v517 = vpop.permute.xlu0 %516
      %518 = vrot.lane.b32.xlu0 %v275, 16
      %v519 = vpop.permute.xlu0 %518
      %520 = vrot.lane.b32.xlu0 %v277, 16
      %v521 = vpop.permute.xlu0 %520
      %522 = vrot.lane.b32.xlu0 %v280, 16
      %v523 = vpop.permute.xlu0 %522
      %524 = vrot.lane.b32.xlu0 %v282, 16
      %v525 = vpop.permute.xlu0 %524
      %526 = vrot.lane.b32.xlu0 %v285, 16
      %v527 = vpop.permute.xlu0 %526
      %528 = vrot.lane.b32.xlu0 %v287, 16
      %v529 = vpop.permute.xlu0 %528
      %530 = vrot.lane.b32.xlu0 %v290, 16
      %v531 = vpop.permute.xlu0 %530
      %532 = vrot.lane.b32.xlu0 %v292, 16
      %v533 = vpop.permute.xlu0 %532
      %534 = vrot.lane.b32.xlu0 %v295, 16
      %v535 = vpop.permute.xlu0 %534
      %536 = vrot.lane.b32.xlu0 %v297, 16
      %v537 = vpop.permute.xlu0 %536
      %538 = vrot.lane.b32.xlu0 %v300, 16
      %v539 = vpop.permute.xlu0 %538
      %540 = vrot.lane.b32.xlu0 %v302, 16
      %v541 = vpop.permute.xlu0 %540
      %542 = vrot.lane.b32.xlu0 %v349, 16
      %v543 = vpop.permute.xlu0 %542
      %544 = vrot.lane.b32.xlu0 %v351, 16
      %v545 = vpop.permute.xlu0 %544
      %562 = vrot.lane.b32.xlu0 %v311, 20
      %v563 = vpop.permute.xlu0 %562
      %564 = vrot.lane.b32.xlu0 %v313, 20
      %v565 = vpop.permute.xlu0 %564
      %566 = vrot.lane.b32.xlu0 %v316, 20
      %v567 = vpop.permute.xlu0 %566
      %568 = vrot.lane.b32.xlu0 %v318, 20
      %v569 = vpop.permute.xlu0 %568
      %570 = vrot.lane.b32.xlu0 %v321, 20
      %v571 = vpop.permute.xlu0 %570
      %572 = vrot.lane.b32.xlu0 %v323, 20
      %v573 = vpop.permute.xlu0 %572
      %574 = vrot.lane.b32.xlu0 %v326, 20
      %v575 = vpop.permute.xlu0 %574
      %576 = vrot.lane.b32.xlu0 %v328, 20
      %v577 = vpop.permute.xlu0 %576
      %578 = vrot.lane.b32.xlu0 %v331, 20
      %v579 = vpop.permute.xlu0 %578
      %580 = vrot.lane.b32.xlu0 %v333, 20
      %v581 = vpop.permute.xlu0 %580
      %582 = vrot.lane.b32.xlu0 %v336, 20
      %v583 = vpop.permute.xlu0 %582
      %584 = vrot.lane.b32.xlu0 %v338, 20
      %v585 = vpop.permute.xlu0 %584
      %586 = vrot.lane.b32.xlu0 %v341, 20
      %v587 = vpop.permute.xlu0 %586
      %588 = vrot.lane.b32.xlu0 %v343, 20
      %v589 = vpop.permute.xlu0 %588
      %590 = vrot.lane.b32.xlu0 %v354, 20
      %v591 = vpop.permute.xlu0 %590
      %592 = vrot.lane.b32.xlu0 %v356, 20
      %v593 = vpop.permute.xlu0 %592
      %610 = vrot.lane.b32.xlu0 %v214, 24
      %v611 = vpop.permute.xlu0 %610
      %612 = vrot.lane.b32.xlu0 %v215, 24
      %v613 = vpop.permute.xlu0 %612
      %614 = vrot.lane.b32.xlu0 %v217, 24
      %v615 = vpop.permute.xlu0 %614
      %616 = vrot.lane.b32.xlu0 %v218, 24
      %v617 = vpop.permute.xlu0 %616
      %618 = vrot.lane.b32.xlu0 %v220, 24
      %v619 = vpop.permute.xlu0 %618
      %620 = vrot.lane.b32.xlu0 %v221, 24
      %v621 = vpop.permute.xlu0 %620
      %622 = vrot.lane.b32.xlu0 %v223, 24
      %v623 = vpop.permute.xlu0 %622
      %624 = vrot.lane.b32.xlu0 %v224, 24
      %v625 = vpop.permute.xlu0 %624
      %626 = vrot.lane.b32.xlu0 %v226, 24
      %v627 = vpop.permute.xlu0 %626
      %628 = vrot.lane.b32.xlu0 %v227, 24
      %v629 = vpop.permute.xlu0 %628
      %630 = vrot.lane.b32.xlu0 %v229, 24
      %v631 = vpop.permute.xlu0 %630
      %632 = vrot.lane.b32.xlu0 %v230, 24
      %v633 = vpop.permute.xlu0 %632
      %634 = vrot.lane.b32.xlu0 %v232, 24
      %v635 = vpop.permute.xlu0 %634
      %636 = vrot.lane.b32.xlu0 %v233, 24
      %v637 = vpop.permute.xlu0 %636
      %638 = vrot.lane.b32.xlu0 %v235, 24
      %v639 = vpop.permute.xlu0 %638
      %640 = vrot.lane.b32.xlu0 %v236, 24
      %v641 = vpop.permute.xlu0 %640
      %658 = vrot.lane.b32.xlu0 %v275, 28
      %v659 = vpop.permute.xlu0 %658
      %660 = vrot.lane.b32.xlu0 %v277, 28
      %v661 = vpop.permute.xlu0 %660
      %662 = vrot.lane.b32.xlu0 %v280, 28
      %v663 = vpop.permute.xlu0 %662
      %664 = vrot.lane.b32.xlu0 %v282, 28
      %v665 = vpop.permute.xlu0 %664
      %666 = vrot.lane.b32.xlu0 %v285, 28
      %v667 = vpop.permute.xlu0 %666
      %668 = vrot.lane.b32.xlu0 %v287, 28
      %v669 = vpop.permute.xlu0 %668
      %670 = vrot.lane.b32.xlu0 %v290, 28
      %v671 = vpop.permute.xlu0 %670
      %672 = vrot.lane.b32.xlu0 %v292, 28
      %v673 = vpop.permute.xlu0 %672
      %674 = vrot.lane.b32.xlu0 %v295, 28
      %v675 = vpop.permute.xlu0 %674
      %676 = vrot.lane.b32.xlu0 %v297, 28
      %v677 = vpop.permute.xlu0 %676
      %678 = vrot.lane.b32.xlu0 %v300, 28
      %v679 = vpop.permute.xlu0 %678
      %680 = vrot.lane.b32.xlu0 %v302, 28
      %v681 = vpop.permute.xlu0 %680
      %682 = vrot.lane.b32.xlu0 %v349, 28
      %v683 = vpop.permute.xlu0 %682
      %684 = vrot.lane.b32.xlu0 %v351, 28
      %v685 = vpop.permute.xlu0 %684
      %686 = vrot.lane.b32.xlu0 %v362, 28
      %v687 = vpop.permute.xlu0 %686
      %688 = vrot.lane.b32.xlu0 %v364, 28
      %v689 = vpop.permute.xlu0 %688
      %706 = vrot.lane.b32.xlu0 %v316, 32
      %v707 = vpop.permute.xlu0 %706
      %708 = vrot.lane.b32.xlu0 %v318, 32
      %v709 = vpop.permute.xlu0 %708
      %710 = vrot.lane.b32.xlu0 %v321, 32
      %v711 = vpop.permute.xlu0 %710
      %712 = vrot.lane.b32.xlu0 %v323, 32
      %v713 = vpop.permute.xlu0 %712
      %714 = vrot.lane.b32.xlu0 %v326, 32
      %v715 = vpop.permute.xlu0 %714
      %716 = vrot.lane.b32.xlu0 %v328, 32
      %v717 = vpop.permute.xlu0 %716
      %718 = vrot.lane.b32.xlu0 %v331, 32
      %v719 = vpop.permute.xlu0 %718
      %720 = vrot.lane.b32.xlu0 %v333, 32
      %v721 = vpop.permute.xlu0 %720
      %722 = vrot.lane.b32.xlu0 %v336, 32
      %v723 = vpop.permute.xlu0 %722
      %724 = vrot.lane.b32.xlu0 %v338, 32
      %v725 = vpop.permute.xlu0 %724
      %726 = vrot.lane.b32.xlu0 %v341, 32
      %v727 = vpop.permute.xlu0 %726
      %728 = vrot.lane.b32.xlu0 %v343, 32
      %v729 = vpop.permute.xlu0 %728
      %730 = vrot.lane.b32.xlu0 %v354, 32
      %v731 = vpop.permute.xlu0 %730
      %732 = vrot.lane.b32.xlu0 %v356, 32
      %v733 = vpop.permute.xlu0 %732
      %734 = vrot.lane.b32.xlu0 %v367, 32
      %v735 = vpop.permute.xlu0 %734
      %736 = vrot.lane.b32.xlu0 %v369, 32
      %v737 = vpop.permute.xlu0 %736
      %vm754 = vcmask 31744
      %v755 = vsel %vm754, %v208, %v371
      %v756 = vsel %vm754, %v209, %v373
      %v757 = vsel %vm754, %v211, %v375
      %v758 = vsel %vm754, %v212, %v377
      %v759 = vsel %vm754, %v214, %v379
      %v760 = vsel %vm754, %v215, %v381
      %v761 = vsel %vm754, %v217, %v383
      %v762 = vsel %vm754, %v218, %v385
      %v763 = vsel %vm754, %v220, %v387
      %v764 = vsel %vm754, %v221, %v389
      %v765 = vsel %vm754, %v223, %v391
      %v766 = vsel %vm754, %v224, %v393
      %v767 = vsel %vm754, %v226, %v395
      %v768 = vsel %vm754, %v227, %v397
      %v769 = vsel %vm754, %v229, %v399
      %v770 = vsel %vm754, %v230, %v401
      %vm771 = vcmask 64512
      %v772 = vsel %vm771, %v755, %v419
      %v773 = vsel %vm771, %v756, %v421
      %v774 = vsel %vm771, %v757, %v423
      %v775 = vsel %vm771, %v758, %v425
      %v776 = vsel %vm771, %v759, %v427
      %v777 = vsel %vm771, %v760, %v429
      %v778 = vsel %vm771, %v761, %v431
      %v779 = vsel %vm771, %v762, %v433
      %v780 = vsel %vm771, %v763, %v435
      %v781 = vsel %vm771, %v764, %v437
      %v782 = vsel %vm771, %v765, %v439
      %v783 = vsel %vm771, %v766, %v441
      %v784 = vsel %vm771, %v767, %v443
      %v785 = vsel %vm771, %v768, %v445
      %v786 = vsel %vm771, %v769, %v447
      %v787 = vsel %vm771, %v770, %v449
      %vm788 = vcmask 97280
      %v789 = vsel %vm788, %v772, %v467
      %v790 = vsel %vm788, %v773, %v469
      %v791 = vsel %vm788, %v774, %v471
      %v792 = vsel %vm788, %v775, %v473
      %v793 = vsel %vm788, %v776, %v475
      %v794 = vsel %vm788, %v777, %v477
      %v795 = vsel %vm788, %v778, %v479
      %v796 = vsel %vm788, %v779, %v481
      %v797 = vsel %vm788, %v780, %v483
      %v798 = vsel %vm788, %v781, %v485
      %v799 = vsel %vm788, %v782, %v487
      %v800 = vsel %vm788, %v783, %v489
      %v801 = vsel %vm788, %v784, %v491
      %v802 = vsel %vm788, %v785, %v493
      %v803 = vsel %vm788, %v786, %v495
      %v804 = vsel %vm788, %v787, %v497
      %vm805 = vcmask 130048
      %v806 = vsel %vm805, %v789, %v515
      %v807 = vsel %vm805, %v790, %v517
      %v808 = vsel %vm805, %v791, %v519
      %v809 = vsel %vm805, %v792, %v521
      %v810 = vsel %vm805, %v793, %v523
      %v811 = vsel %vm805, %v794, %v525
      %v812 = vsel %vm805, %v795, %v527
      %v813 = vsel %vm805, %v796, %v529
      %v814 = vsel %vm805, %v797, %v531
      %v815 = vsel %vm805, %v798, %v533
      %v816 = vsel %vm805, %v799, %v535
      %v817 = vsel %vm805, %v800, %v537
      %v818 = vsel %vm805, %v801, %v539
      %v819 = vsel %vm805, %v802, %v541
      %v820 = vsel %vm805, %v803, %v543
      %v821 = vsel %vm805, %v804, %v545
      %vm822 = vcmask 162816
      %v823 = vsel %vm822, %v806, %v563
      %v824 = vsel %vm822, %v807, %v565
      %v825 = vsel %vm822, %v808, %v567
      %v826 = vsel %vm822, %v809, %v569
      %v827 = vsel %vm822, %v810, %v571
      %v828 = vsel %vm822, %v811, %v573
      %v829 = vsel %vm822, %v812, %v575
      %v830 = vsel %vm822, %v813, %v577
      %v831 = vsel %vm822, %v814, %v579
      %v832 = vsel %vm822, %v815, %v581
      %v833 = vsel %vm822, %v816, %v583
      %v834 = vsel %vm822, %v817, %v585
      %v835 = vsel %vm822, %v818, %v587
      %v836 = vsel %vm822, %v819, %v589
      %v837 = vsel %vm822, %v820, %v591
      %v838 = vsel %vm822, %v821, %v593
      %vm839 = vcmask 195584
      %v840 = vsel %vm839, %v823, %v611
      %v841 = vsel %vm839, %v824, %v613
      %v842 = vsel %vm839, %v825, %v615
      %v843 = vsel %vm839, %v826, %v617
      %v844 = vsel %vm839, %v827, %v619
      %v845 = vsel %vm839, %v828, %v621
      %v846 = vsel %vm839, %v829, %v623
      %v847 = vsel %vm839, %v830, %v625
      %v848 = vsel %vm839, %v831, %v627
      %v849 = vsel %vm839, %v832, %v629
      %v850 = vsel %vm839, %v833, %v631
      %v851 = vsel %vm839, %v834, %v633
      %v852 = vsel %vm839, %v835, %v635
      %v853 = vsel %vm839, %v836, %v637
      %v854 = vsel %vm839, %v837, %v639
      %v855 = vsel %vm839, %v838, %v641
      %vm856 = vcmask 228352
      %v857 = vsel %vm856, %v840, %v659
      %v858 = vsel %vm856, %v841, %v661
      %v859 = vsel %vm856, %v842, %v663
      %v860 = vsel %vm856, %v843, %v665
      %v861 = vsel %vm856, %v844, %v667
      %v862 = vsel %vm856, %v845, %v669
      %v863 = vsel %vm856, %v846, %v671
      %v864 = vsel %vm856, %v847, %v673
      %v865 = vsel %vm856, %v848, %v675
      %v866 = vsel %vm856, %v849, %v677
      %v867 = vsel %vm856, %v850, %v679
      %v868 = vsel %vm856, %v851, %v681
      %v869 = vsel %vm856, %v852, %v683
      %v870 = vsel %vm856, %v853, %v685
      %v871 = vsel %vm856, %v854, %v687
      %v872 = vsel %vm856, %v855, %v689
      %vm873 = vcmask 261120
      %v874 = vsel %vm873, %v857, %v707
      %v875 = vsel %vm873, %v858, %v709
      %v876 = vsel %vm873, %v859, %v711
      %v877 = vsel %vm873, %v860, %v713
      %v878 = vsel %vm873, %v861, %v715
      %v879 = vsel %vm873, %v862, %v717
      %v880 = vsel %vm873, %v863, %v719
      %v881 = vsel %vm873, %v864, %v721
      %v882 = vsel %vm873, %v865, %v723
      %v883 = vsel %vm873, %v866, %v725
      %v884 = vsel %vm873, %v867, %v727
      %v885 = vsel %vm873, %v868, %v729
      %v886 = vsel %vm873, %v869, %v731
      %v887 = vsel %vm873, %v870, %v733
      %v888 = vsel %vm873, %v871, %v735
      %v889 = vsel %vm873, %v872, %v737
      %v890 = vld [vmem:[%s1] sm:$0xff]
      %v891 = vld [vmem:[%s1 + $0x8] sm:$0xff]
      %v892 = vld [vmem:[%s1 + $0x10] sm:$0xff]
      %v893 = vld [vmem:[%s1 + $0x18] sm:$0xff]
      %v894 = vld [vmem:[%s1 + $0x20] sm:$0xf]
      %v895 = vld [vmem:[%s2] sm:$0x1]
      %v897 = vperm.slane %v895, 0
      %vm899 = vcmask 293888
      %v901 = vsel %vm899, %v874, 0
      %v904 = vsel %vm899, %v875, 0
      %v907 = vsel %vm899, %v876, 0
      %v910 = vsel %vm899, %v877, 0
      %v913 = vsel %vm899, %v878, 0
      %v916 = vsel %vm899, %v879, 0
      %v919 = vsel %vm899, %v880, 0
      %v922 = vsel %vm899, %v881, 0
      %v925 = vsel %vm899, %v882, 0
      %v928 = vsel %vm899, %v883, 0
      %v931 = vsel %vm899, %v884, 0
      %v934 = vsel %vm899, %v885, 0
      %v937 = vsel %vm899, %v886, 0
      %v940 = vsel %vm899, %v887, 0
      %v943 = vsel %vm899, %v888, 0
      %v946 = vsel %vm899, %v889, 0
      %vm948 = vcmask 1043456
      %v950 = vsel %vm948, %v894, 0
      %952 = vmatpush.msra.mxu0 0.0
      %953 = vmatpush.msra.mxu0 0.0
      %954 = vmatpush.msra.mxu0 0.0
      %955 = vmatpush.msra.mxu0 0.0
      %956 = vmatpush.msra.mxu0 0.0
      %957 = vmatpush.msra.mxu0 0.0
      %958 = vmatpush.msra.mxu0 0.0
      %959 = vmatpush.msra.mxu0 0.0
      %960 = vmatpush.msra.mxu0 0.0
      %961 = vmatpush.msra.mxu0 0.0
      %962 = vmatpush.msra.mxu0 0.0
      %963 = vmatpush.msra.mxu0 %v950
      %964 = vmatpush.msra.mxu0 %v893
      %965 = vmatpush.msra.mxu0 %v892
      %966 = vmatpush.msra.mxu0 %v891
      %967 = vmatpush.msra.mxu0 %v890
      %968 = vmatmul.f32.gmra.mxu0 %v901
      %v969 = vpop.f32.mrf.mxu0
      %v970 = vadd.f32 %v897, %v969
      %971 = vmatmul.f32.gmra.mxu0 %v904
      %v972 = vpop.f32.mrf.mxu0
      %v973 = vadd.f32 %v897, %v972
      %974 = vmatmul.f32.gmra.mxu0 %v907
      %v975 = vpop.f32.mrf.mxu0
      %v976 = vadd.f32 %v897, %v975
      %977 = vmatmul.f32.gmra.mxu0 %v910
      %v978 = vpop.f32.mrf.mxu0
      %v979 = vadd.f32 %v897, %v978
      %980 = vmatmul.f32.gmra.mxu0 %v913
      %v981 = vpop.f32.mrf.mxu0
      %v982 = vadd.f32 %v897, %v981
      %983 = vmatmul.f32.gmra.mxu0 %v916
      %v984 = vpop.f32.mrf.mxu0
      %v985 = vadd.f32 %v897, %v984
      %986 = vmatmul.f32.gmra.mxu0 %v919
      %v987 = vpop.f32.mrf.mxu0
      %v988 = vadd.f32 %v897, %v987
      %989 = vmatmul.f32.gmra.mxu0 %v922
      %v990 = vpop.f32.mrf.mxu0
      %v991 = vadd.f32 %v897, %v990
      %992 = vmatmul.f32.gmra.mxu0 %v925
      %v993 = vpop.f32.mrf.mxu0
      %v994 = vadd.f32 %v897, %v993
      %995 = vmatmul.f32.gmra.mxu0 %v928
      %v996 = vpop.f32.mrf.mxu0
      %v997 = vadd.f32 %v897, %v996
      %998 = vmatmul.f32.gmra.mxu0 %v931
      %v999 = vpop.f32.mrf.mxu0
      %v1000 = vadd.f32 %v897, %v999
      %1001 = vmatmul.f32.gmra.mxu0 %v934
      %v1002 = vpop.f32.mrf.mxu0
      %v1003 = vadd.f32 %v897, %v1002
      %1004 = vmatmul.f32.gmra.mxu0 %v937
      %v1005 = vpop.f32.mrf.mxu0
      %v1006 = vadd.f32 %v897, %v1005
      %1007 = vmatmul.f32.gmra.mxu0 %v940
      %v1008 = vpop.f32.mrf.mxu0
      %v1009 = vadd.f32 %v897, %v1008
      %1010 = vmatmul.f32.gmra.mxu0 %v943
      %v1011 = vpop.f32.mrf.mxu0
      %v1012 = vadd.f32 %v897, %v1011
      %1013 = vmatmul.f32.gmra.mxu0 %v946
      %v1014 = vpop.f32.mrf.mxu0
      %v1015 = vadd.f32 %v897, %v1014
      %1016 = vdwg.mxu0
      %v1017 = vmax.f32 %v970, 0.0
      %v1018 = vmax.f32 %v973, 0.0
      %v1019 = vmax.f32 %v976, 0.0
      %v1020 = vmax.f32 %v979, 0.0
      %v1021 = vmax.f32 %v982, 0.0
      %v1022 = vmax.f32 %v985, 0.0
      %v1023 = vmax.f32 %v988, 0.0
      %v1024 = vmax.f32 %v991, 0.0
      %v1025 = vmax.f32 %v994, 0.0
      %v1026 = vmax.f32 %v997, 0.0
      %v1027 = vmax.f32 %v1000, 0.0
      %v1028 = vmax.f32 %v1003, 0.0
      %v1029 = vmax.f32 %v1006, 0.0
      %v1030 = vmax.f32 %v1009, 0.0
      %v1031 = vmax.f32 %v1012, 0.0
      %v1032 = vmax.f32 %v1015, 0.0
      %v1033 = vrot.slane %v1017, 4
      %vm1034 = vcmask 1047556
      %v1035 = vsel %vm1034, 0.0, %v1033
      %v1037 = vunpack.c.l.s4 1983009808
      %v1038 = vunpack.c.0.s8 %v1037
      %v1039 = vperm.slane %v1017, %v1038
      %v1041 = vunpack.c.l.s4 1983009808
      %v1042 = vunpack.c.0.s8 %v1041
      %v1043 = vperm.slane %v1035, %v1042
      %v1044 = vrot.slane %v1039, 4
      %v1045 = vsel %vm1034, 0.0, %v1044
      %v1047 = vunpack.c.l.s4 1934713408
      %v1048 = vunpack.c.0.s8 %v1047
      %v1049 = vperm.slane %v1039, %v1048
      %v1051 = vunpack.c.l.s4 1934713408
      %v1052 = vunpack.c.0.s8 %v1051
      %v1053 = vperm.slane %v1045, %v1052
      %v1054 = vrot.slane %v1043, 4
      %v1055 = vsel %vm1034, 0.0, %v1054
      %v1057 = vunpack.c.l.s4 1934713408
      %v1058 = vunpack.c.0.s8 %v1057
      %v1059 = vperm.slane %v1043, %v1058
      %v1061 = vunpack.c.l.s4 1934713408
      %v1062 = vunpack.c.0.s8 %v1061
      %v1063 = vperm.slane %v1055, %v1062
      %v1064 = vrot.slane %v1049, 4
      %v1065 = vsel %vm1034, 0.0, %v1064
      %v1066 = vrot.slane %v1053, 4
      %v1067 = vsel %vm1034, 0.0, %v1066
      %v1068 = vrot.slane %v1059, 4
      %v1069 = vsel %vm1034, 0.0, %v1068
      %v1070 = vrot.slane %v1063, 4
      %v1071 = vsel %vm1034, 0.0, %v1070
      %v1072 = vrot.slane %v1018, 4
      %v1073 = vsel %vm1034, 0.0, %v1072
      %v1075 = vunpack.c.l.s4 1983009808
      %v1076 = vunpack.c.0.s8 %v1075
      %v1077 = vperm.slane %v1018, %v1076
      %v1079 = vunpack.c.l.s4 1983009808
      %v1080 = vunpack.c.0.s8 %v1079
      %v1081 = vperm.slane %v1073, %v1080
      %v1082 = vrot.slane %v1077, 4
      %v1083 = vsel %vm1034, 0.0, %v1082
      %v1085 = vunpack.c.l.s4 1934713408
      %v1086 = vunpack.c.0.s8 %v1085
      %v1087 = vperm.slane %v1077, %v1086
      %v1089 = vunpack.c.l.s4 1934713408
      %v1090 = vunpack.c.0.s8 %v1089
      %v1091 = vperm.slane %v1083, %v1090
      %v1092 = vrot.slane %v1081, 4
      %v1093 = vsel %vm1034, 0.0, %v1092
      %v1095 = vunpack.c.l.s4 1934713408
      %v1096 = vunpack.c.0.s8 %v1095
      %v1097 = vperm.slane %v1081, %v1096
      %v1099 = vunpack.c.l.s4 1934713408
      %v1100 = vunpack.c.0.s8 %v1099
      %v1101 = vperm.slane %v1093, %v1100
      %v1102 = vrot.slane %v1087, 4
      %v1103 = vsel %vm1034, 0.0, %v1102
      %v1104 = vrot.slane %v1091, 4
      %v1105 = vsel %vm1034, 0.0, %v1104
      %v1106 = vrot.slane %v1097, 4
      %v1107 = vsel %vm1034, 0.0, %v1106
      %v1108 = vrot.slane %v1101, 4
      %v1109 = vsel %vm1034, 0.0, %v1108
      %v1110 = vrot.slane %v1019, 4
      %v1111 = vsel %vm1034, 0.0, %v1110
      %v1113 = vunpack.c.l.s4 1983009808
      %v1114 = vunpack.c.0.s8 %v1113
      %v1115 = vperm.slane %v1019, %v1114
      %v1117 = vunpack.c.l.s4 1983009808
      %v1118 = vunpack.c.0.s8 %v1117
      %v1119 = vperm.slane %v1111, %v1118
      %v1120 = vrot.slane %v1115, 4
      %v1121 = vsel %vm1034, 0.0, %v1120
      %v1123 = vunpack.c.l.s4 1934713408
      %v1124 = vunpack.c.0.s8 %v1123
      %v1125 = vperm.slane %v1115, %v1124
      %v1127 = vunpack.c.l.s4 1934713408
      %v1128 = vunpack.c.0.s8 %v1127
      %v1129 = vperm.slane %v1121, %v1128
      %v1130 = vrot.slane %v1119, 4
      %v1131 = vsel %vm1034, 0.0, %v1130
      %v1133 = vunpack.c.l.s4 1934713408
      %v1134 = vunpack.c.0.s8 %v1133
      %v1135 = vperm.slane %v1119, %v1134
      %v1137 = vunpack.c.l.s4 1934713408
      %v1138 = vunpack.c.0.s8 %v1137
      %v1139 = vperm.slane %v1131, %v1138
      %v1140 = vrot.slane %v1125, 4
      %v1141 = vsel %vm1034, 0.0, %v1140
      %v1142 = vrot.slane %v1129, 4
      %v1143 = vsel %vm1034, 0.0, %v1142
      %v1144 = vrot.slane %v1135, 4
      %v1145 = vsel %vm1034, 0.0, %v1144
      %v1146 = vrot.slane %v1139, 4
      %v1147 = vsel %vm1034, 0.0, %v1146
      %v1148 = vrot.slane %v1020, 4
      %v1149 = vsel %vm1034, 0.0, %v1148
      %v1151 = vunpack.c.l.s4 1983009808
      %v1152 = vunpack.c.0.s8 %v1151
      %v1153 = vperm.slane %v1020, %v1152
      %v1155 = vunpack.c.l.s4 1983009808
      %v1156 = vunpack.c.0.s8 %v1155
      %v1157 = vperm.slane %v1149, %v1156
      %v1158 = vrot.slane %v1153, 4
      %v1159 = vsel %vm1034, 0.0, %v1158
      %v1161 = vunpack.c.l.s4 1934713408
      %v1162 = vunpack.c.0.s8 %v1161
      %v1163 = vperm.slane %v1153, %v1162
      %v1165 = vunpack.c.l.s4 1934713408
      %v1166 = vunpack.c.0.s8 %v1165
      %v1167 = vperm.slane %v1159, %v1166
      %v1168 = vrot.slane %v1157, 4
      %v1169 = vsel %vm1034, 0.0, %v1168
      %v1171 = vunpack.c.l.s4 1934713408
      %v1172 = vunpack.c.0.s8 %v1171
      %v1173 = vperm.slane %v1157, %v1172
      %v1175 = vunpack.c.l.s4 1934713408
      %v1176 = vunpack.c.0.s8 %v1175
      %v1177 = vperm.slane %v1169, %v1176
      %v1178 = vrot.slane %v1163, 4
      %v1179 = vsel %vm1034, 0.0, %v1178
      %v1180 = vrot.slane %v1167, 4
      %v1181 = vsel %vm1034, 0.0, %v1180
      %v1182 = vrot.slane %v1173, 4
      %v1183 = vsel %vm1034, 0.0, %v1182
      %v1184 = vrot.slane %v1177, 4
      %v1185 = vsel %vm1034, 0.0, %v1184
      %v1186 = vrot.slane %v1021, 4
      %v1187 = vsel %vm1034, 0.0, %v1186
      %v1189 = vunpack.c.l.s4 1983009808
      %v1190 = vunpack.c.0.s8 %v1189
      %v1191 = vperm.slane %v1021, %v1190
      %v1193 = vunpack.c.l.s4 1983009808
      %v1194 = vunpack.c.0.s8 %v1193
      %v1195 = vperm.slane %v1187, %v1194
      %v1196 = vrot.slane %v1191, 4
      %v1197 = vsel %vm1034, 0.0, %v1196
      %v1199 = vunpack.c.l.s4 1934713408
      %v1200 = vunpack.c.0.s8 %v1199
      %v1201 = vperm.slane %v1191, %v1200
      %v1203 = vunpack.c.l.s4 1934713408
      %v1204 = vunpack.c.0.s8 %v1203
      %v1205 = vperm.slane %v1197, %v1204
      %v1206 = vrot.slane %v1195, 4
      %v1207 = vsel %vm1034, 0.0, %v1206
      %v1209 = vunpack.c.l.s4 1934713408
      %v1210 = vunpack.c.0.s8 %v1209
      %v1211 = vperm.slane %v1195, %v1210
      %v1213 = vunpack.c.l.s4 1934713408
      %v1214 = vunpack.c.0.s8 %v1213
      %v1215 = vperm.slane %v1207, %v1214
      %v1216 = vrot.slane %v1201, 4
      %v1217 = vsel %vm1034, 0.0, %v1216
      %v1218 = vrot.slane %v1205, 4
      %v1219 = vsel %vm1034, 0.0, %v1218
      %v1220 = vrot.slane %v1211, 4
      %v1221 = vsel %vm1034, 0.0, %v1220
      %v1222 = vrot.slane %v1215, 4
      %v1223 = vsel %vm1034, 0.0, %v1222
      %v1224 = vrot.slane %v1022, 4
      %v1225 = vsel %vm1034, 0.0, %v1224
      %v1227 = vunpack.c.l.s4 1983009808
      %v1228 = vunpack.c.0.s8 %v1227
      %v1229 = vperm.slane %v1022, %v1228
      %v1231 = vunpack.c.l.s4 1983009808
      %v1232 = vunpack.c.0.s8 %v1231
      %v1233 = vperm.slane %v1225, %v1232
      %v1234 = vrot.slane %v1229, 4
      %v1235 = vsel %vm1034, 0.0, %v1234
      %v1237 = vunpack.c.l.s4 1934713408
      %v1238 = vunpack.c.0.s8 %v1237
      %v1239 = vperm.slane %v1229, %v1238
      %v1241 = vunpack.c.l.s4 1934713408
      %v1242 = vunpack.c.0.s8 %v1241
      %v1243 = vperm.slane %v1235, %v1242
      %v1244 = vrot.slane %v1233, 4
      %v1245 = vsel %vm1034, 0.0, %v1244
      %v1247 = vunpack.c.l.s4 1934713408
      %v1248 = vunpack.c.0.s8 %v1247
      %v1249 = vperm.slane %v1233, %v1248
      %v1251 = vunpack.c.l.s4 1934713408
      %v1252 = vunpack.c.0.s8 %v1251
      %v1253 = vperm.slane %v1245, %v1252
      %v1254 = vrot.slane %v1239, 4
      %v1255 = vsel %vm1034, 0.0, %v1254
      %v1256 = vrot.slane %v1243, 4
      %v1257 = vsel %vm1034, 0.0, %v1256
      %v1258 = vrot.slane %v1249, 4
      %v1259 = vsel %vm1034, 0.0, %v1258
      %v1260 = vrot.slane %v1253, 4
      %v1261 = vsel %vm1034, 0.0, %v1260
      %v1262 = vrot.slane %v1023, 4
      %v1263 = vsel %vm1034, 0.0, %v1262
      %v1265 = vunpack.c.l.s4 1983009808
      %v1266 = vunpack.c.0.s8 %v1265
      %v1267 = vperm.slane %v1023, %v1266
      %v1269 = vunpack.c.l.s4 1983009808
      %v1270 = vunpack.c.0.s8 %v1269
      %v1271 = vperm.slane %v1263, %v1270
      %v1272 = vrot.slane %v1267, 4
      %v1273 = vsel %vm1034, 0.0, %v1272
      %v1275 = vunpack.c.l.s4 1934713408
      %v1276 = vunpack.c.0.s8 %v1275
      %v1277 = vperm.slane %v1267, %v1276
      %v1279 = vunpack.c.l.s4 1934713408
      %v1280 = vunpack.c.0.s8 %v1279
      %v1281 = vperm.slane %v1273, %v1280
      %v1282 = vrot.slane %v1271, 4
      %v1283 = vsel %vm1034, 0.0, %v1282
      %v1285 = vunpack.c.l.s4 1934713408
      %v1286 = vunpack.c.0.s8 %v1285
      %v1287 = vperm.slane %v1271, %v1286
      %v1289 = vunpack.c.l.s4 1934713408
      %v1290 = vunpack.c.0.s8 %v1289
      %v1291 = vperm.slane %v1283, %v1290
      %v1292 = vrot.slane %v1277, 4
      %v1293 = vsel %vm1034, 0.0, %v1292
      %v1294 = vrot.slane %v1281, 4
      %v1295 = vsel %vm1034, 0.0, %v1294
      %v1296 = vrot.slane %v1287, 4
      %v1297 = vsel %vm1034, 0.0, %v1296
      %v1298 = vrot.slane %v1291, 4
      %v1299 = vsel %vm1034, 0.0, %v1298
      %v1300 = vrot.slane %v1024, 4
      %v1301 = vsel %vm1034, 0.0, %v1300
      %v1303 = vunpack.c.l.s4 1983009808
      %v1304 = vunpack.c.0.s8 %v1303
      %v1305 = vperm.slane %v1024, %v1304
      %v1307 = vunpack.c.l.s4 1983009808
      %v1308 = vunpack.c.0.s8 %v1307
      %v1309 = vperm.slane %v1301, %v1308
      %v1310 = vrot.slane %v1305, 4
      %v1311 = vsel %vm1034, 0.0, %v1310
      %v1313 = vunpack.c.l.s4 1934713408
      %v1314 = vunpack.c.0.s8 %v1313
      %v1315 = vperm.slane %v1305, %v1314
      %v1317 = vunpack.c.l.s4 1934713408
      %v1318 = vunpack.c.0.s8 %v1317
      %v1319 = vperm.slane %v1311, %v1318
      %v1320 = vrot.slane %v1309, 4
      %v1321 = vsel %vm1034, 0.0, %v1320
      %v1323 = vunpack.c.l.s4 1934713408
      %v1324 = vunpack.c.0.s8 %v1323
      %v1325 = vperm.slane %v1309, %v1324
      %v1327 = vunpack.c.l.s4 1934713408
      %v1328 = vunpack.c.0.s8 %v1327
      %v1329 = vperm.slane %v1321, %v1328
      %v1330 = vrot.slane %v1315, 4
      %v1331 = vsel %vm1034, 0.0, %v1330
      %v1332 = vrot.slane %v1319, 4
      %v1333 = vsel %vm1034, 0.0, %v1332
      %v1334 = vrot.slane %v1325, 4
      %v1335 = vsel %vm1034, 0.0, %v1334
      %v1336 = vrot.slane %v1329, 4
      %v1337 = vsel %vm1034, 0.0, %v1336
      %v1338 = vrot.slane %v1025, 4
      %v1339 = vsel %vm1034, 0.0, %v1338
      %v1341 = vunpack.c.l.s4 1983009808
      %v1342 = vunpack.c.0.s8 %v1341
      %v1343 = vperm.slane %v1025, %v1342
      %v1345 = vunpack.c.l.s4 1983009808
      %v1346 = vunpack.c.0.s8 %v1345
      %v1347 = vperm.slane %v1339, %v1346
      %v1348 = vrot.slane %v1343, 4
      %v1349 = vsel %vm1034, 0.0, %v1348
      %v1351 = vunpack.c.l.s4 1934713408
      %v1352 = vunpack.c.0.s8 %v1351
      %v1353 = vperm.slane %v1343, %v1352
      %v1355 = vunpack.c.l.s4 1934713408
      %v1356 = vunpack.c.0.s8 %v1355
      %v1357 = vperm.slane %v1349, %v1356
      %v1358 = vrot.slane %v1347, 4
      %v1359 = vsel %vm1034, 0.0, %v1358
      %v1361 = vunpack.c.l.s4 1934713408
      %v1362 = vunpack.c.0.s8 %v1361
      %v1363 = vperm.slane %v1347, %v1362
      %v1365 = vunpack.c.l.s4 1934713408
      %v1366 = vunpack.c.0.s8 %v1365
      %v1367 = vperm.slane %v1359, %v1366
      %v1368 = vrot.slane %v1353, 4
      %v1369 = vsel %vm1034, 0.0, %v1368
      %v1370 = vrot.slane %v1357, 4
      %v1371 = vsel %vm1034, 0.0, %v1370
      %v1372 = vrot.slane %v1363, 4
      %v1373 = vsel %vm1034, 0.0, %v1372
      %v1374 = vrot.slane %v1367, 4
      %v1375 = vsel %vm1034, 0.0, %v1374
      %v1376 = vrot.slane %v1026, 4
      %v1377 = vsel %vm1034, 0.0, %v1376
      %v1379 = vunpack.c.l.s4 1983009808
      %v1380 = vunpack.c.0.s8 %v1379
      %v1381 = vperm.slane %v1026, %v1380
      %v1383 = vunpack.c.l.s4 1983009808
      %v1384 = vunpack.c.0.s8 %v1383
      %v1385 = vperm.slane %v1377, %v1384
      %v1386 = vrot.slane %v1381, 4
      %v1387 = vsel %vm1034, 0.0, %v1386
      %v1389 = vunpack.c.l.s4 1934713408
      %v1390 = vunpack.c.0.s8 %v1389
      %v1391 = vperm.slane %v1381, %v1390
      %v1393 = vunpack.c.l.s4 1934713408
      %v1394 = vunpack.c.0.s8 %v1393
      %v1395 = vperm.slane %v1387, %v1394
      %v1396 = vrot.slane %v1385, 4
      %v1397 = vsel %vm1034, 0.0, %v1396
      %v1399 = vunpack.c.l.s4 1934713408
      %v1400 = vunpack.c.0.s8 %v1399
      %v1401 = vperm.slane %v1385, %v1400
      %v1403 = vunpack.c.l.s4 1934713408
      %v1404 = vunpack.c.0.s8 %v1403
      %v1405 = vperm.slane %v1397, %v1404
      %v1406 = vrot.slane %v1391, 4
      %v1407 = vsel %vm1034, 0.0, %v1406
      %v1408 = vrot.slane %v1395, 4
      %v1409 = vsel %vm1034, 0.0, %v1408
      %v1410 = vrot.slane %v1401, 4
      %v1411 = vsel %vm1034, 0.0, %v1410
      %v1412 = vrot.slane %v1405, 4
      %v1413 = vsel %vm1034, 0.0, %v1412
      %v1414 = vrot.slane %v1027, 4
      %v1415 = vsel %vm1034, 0.0, %v1414
      %v1417 = vunpack.c.l.s4 1983009808
      %v1418 = vunpack.c.0.s8 %v1417
      %v1419 = vperm.slane %v1027, %v1418
      %v1421 = vunpack.c.l.s4 1983009808
      %v1422 = vunpack.c.0.s8 %v1421
      %v1423 = vperm.slane %v1415, %v1422
      %v1424 = vrot.slane %v1419, 4
      %v1425 = vsel %vm1034, 0.0, %v1424
      %v1427 = vunpack.c.l.s4 1934713408
      %v1428 = vunpack.c.0.s8 %v1427
      %v1429 = vperm.slane %v1419, %v1428
      %v1431 = vunpack.c.l.s4 1934713408
      %v1432 = vunpack.c.0.s8 %v1431
      %v1433 = vperm.slane %v1425, %v1432
      %v1434 = vrot.slane %v1423, 4
      %v1435 = vsel %vm1034, 0.0, %v1434
      %v1437 = vunpack.c.l.s4 1934713408
      %v1438 = vunpack.c.0.s8 %v1437
      %v1439 = vperm.slane %v1423, %v1438
      %v1441 = vunpack.c.l.s4 1934713408
      %v1442 = vunpack.c.0.s8 %v1441
      %v1443 = vperm.slane %v1435, %v1442
      %v1444 = vrot.slane %v1429, 4
      %v1445 = vsel %vm1034, 0.0, %v1444
      %v1446 = vrot.slane %v1433, 4
      %v1447 = vsel %vm1034, 0.0, %v1446
      %v1448 = vrot.slane %v1439, 4
      %v1449 = vsel %vm1034, 0.0, %v1448
      %v1450 = vrot.slane %v1443, 4
      %v1451 = vsel %vm1034, 0.0, %v1450
      %v1452 = vrot.slane %v1028, 4
      %v1453 = vsel %vm1034, 0.0, %v1452
      %v1455 = vunpack.c.l.s4 1983009808
      %v1456 = vunpack.c.0.s8 %v1455
      %v1457 = vperm.slane %v1028, %v1456
      %v1459 = vunpack.c.l.s4 1983009808
      %v1460 = vunpack.c.0.s8 %v1459
      %v1461 = vperm.slane %v1453, %v1460
      %v1462 = vrot.slane %v1457, 4
      %v1463 = vsel %vm1034, 0.0, %v1462
      %v1465 = vunpack.c.l.s4 1934713408
      %v1466 = vunpack.c.0.s8 %v1465
      %v1467 = vperm.slane %v1457, %v1466
      %v1469 = vunpack.c.l.s4 1934713408
      %v1470 = vunpack.c.0.s8 %v1469
      %v1471 = vperm.slane %v1463, %v1470
      %v1472 = vrot.slane %v1461, 4
      %v1473 = vsel %vm1034, 0.0, %v1472
      %v1475 = vunpack.c.l.s4 1934713408
      %v1476 = vunpack.c.0.s8 %v1475
      %v1477 = vperm.slane %v1461, %v1476
      %v1479 = vunpack.c.l.s4 1934713408
      %v1480 = vunpack.c.0.s8 %v1479
      %v1481 = vperm.slane %v1473, %v1480
      %v1482 = vrot.slane %v1467, 4
      %v1483 = vsel %vm1034, 0.0, %v1482
      %v1484 = vrot.slane %v1471, 4
      %v1485 = vsel %vm1034, 0.0, %v1484
      %v1486 = vrot.slane %v1477, 4
      %v1487 = vsel %vm1034, 0.0, %v1486
      %v1488 = vrot.slane %v1481, 4
      %v1489 = vsel %vm1034, 0.0, %v1488
      %v1490 = vrot.slane %v1029, 4
      %v1491 = vsel %vm1034, 0.0, %v1490
      %v1493 = vunpack.c.l.s4 1983009808
      %v1494 = vunpack.c.0.s8 %v1493
      %v1495 = vperm.slane %v1029, %v1494
      %v1497 = vunpack.c.l.s4 1983009808
      %v1498 = vunpack.c.0.s8 %v1497
      %v1499 = vperm.slane %v1491, %v1498
      %v1500 = vrot.slane %v1495, 4
      %v1501 = vsel %vm1034, 0.0, %v1500
      %v1503 = vunpack.c.l.s4 1934713408
      %v1504 = vunpack.c.0.s8 %v1503
      %v1505 = vperm.slane %v1495, %v1504
      %v1507 = vunpack.c.l.s4 1934713408
      %v1508 = vunpack.c.0.s8 %v1507
      %v1509 = vperm.slane %v1501, %v1508
      %v1510 = vrot.slane %v1499, 4
      %v1511 = vsel %vm1034, 0.0, %v1510
      %v1513 = vunpack.c.l.s4 1934713408
      %v1514 = vunpack.c.0.s8 %v1513
      %v1515 = vperm.slane %v1499, %v1514
      %v1517 = vunpack.c.l.s4 1934713408
      %v1518 = vunpack.c.0.s8 %v1517
      %v1519 = vperm.slane %v1511, %v1518
      %v1520 = vrot.slane %v1505, 4
      %v1521 = vsel %vm1034, 0.0, %v1520
      %v1522 = vrot.slane %v1509, 4
      %v1523 = vsel %vm1034, 0.0, %v1522
      %v1524 = vrot.slane %v1515, 4
      %v1525 = vsel %vm1034, 0.0, %v1524
      %v1526 = vrot.slane %v1519, 4
      %v1527 = vsel %vm1034, 0.0, %v1526
      %v1528 = vrot.slane %v1030, 4
      %v1529 = vsel %vm1034, 0.0, %v1528
      %v1531 = vunpack.c.l.s4 1983009808
      %v1532 = vunpack.c.0.s8 %v1531
      %v1533 = vperm.slane %v1030, %v1532
      %v1535 = vunpack.c.l.s4 1983009808
      %v1536 = vunpack.c.0.s8 %v1535
      %v1537 = vperm.slane %v1529, %v1536
      %v1538 = vrot.slane %v1533, 4
      %v1539 = vsel %vm1034, 0.0, %v1538
      %v1541 = vunpack.c.l.s4 1934713408
      %v1542 = vunpack.c.0.s8 %v1541
      %v1543 = vperm.slane %v1533, %v1542
      %v1545 = vunpack.c.l.s4 1934713408
      %v1546 = vunpack.c.0.s8 %v1545
      %v1547 = vperm.slane %v1539, %v1546
      %v1548 = vrot.slane %v1537, 4
      %v1549 = vsel %vm1034, 0.0, %v1548
      %v1551 = vunpack.c.l.s4 1934713408
      %v1552 = vunpack.c.0.s8 %v1551
      %v1553 = vperm.slane %v1537, %v1552
      %v1555 = vunpack.c.l.s4 1934713408
      %v1556 = vunpack.c.0.s8 %v1555
      %v1557 = vperm.slane %v1549, %v1556
      %v1558 = vrot.slane %v1543, 4
      %v1559 = vsel %vm1034, 0.0, %v1558
      %v1560 = vrot.slane %v1547, 4
      %v1561 = vsel %vm1034, 0.0, %v1560
      %v1562 = vrot.slane %v1553, 4
      %v1563 = vsel %vm1034, 0.0, %v1562
      %v1564 = vrot.slane %v1557, 4
      %v1565 = vsel %vm1034, 0.0, %v1564
      %v1566 = vrot.slane %v1031, 4
      %v1567 = vsel %vm1034, 0.0, %v1566
      %v1569 = vunpack.c.l.s4 1983009808
      %v1570 = vunpack.c.0.s8 %v1569
      %v1571 = vperm.slane %v1031, %v1570
      %v1573 = vunpack.c.l.s4 1983009808
      %v1574 = vunpack.c.0.s8 %v1573
      %v1575 = vperm.slane %v1567, %v1574
      %v1576 = vrot.slane %v1571, 4
      %v1577 = vsel %vm1034, 0.0, %v1576
      %v1579 = vunpack.c.l.s4 1934713408
      %v1580 = vunpack.c.0.s8 %v1579
      %v1581 = vperm.slane %v1571, %v1580
      %v1583 = vunpack.c.l.s4 1934713408
      %v1584 = vunpack.c.0.s8 %v1583
      %v1585 = vperm.slane %v1577, %v1584
      %v1586 = vrot.slane %v1575, 4
      %v1587 = vsel %vm1034, 0.0, %v1586
      %v1589 = vunpack.c.l.s4 1934713408
      %v1590 = vunpack.c.0.s8 %v1589
      %v1591 = vperm.slane %v1575, %v1590
      %v1593 = vunpack.c.l.s4 1934713408
      %v1594 = vunpack.c.0.s8 %v1593
      %v1595 = vperm.slane %v1587, %v1594
      %v1596 = vrot.slane %v1581, 4
      %v1597 = vsel %vm1034, 0.0, %v1596
      %v1598 = vrot.slane %v1585, 4
      %v1599 = vsel %vm1034, 0.0, %v1598
      %v1600 = vrot.slane %v1591, 4
      %v1601 = vsel %vm1034, 0.0, %v1600
      %v1602 = vrot.slane %v1595, 4
      %v1603 = vsel %vm1034, 0.0, %v1602
      %v1604 = vrot.slane %v1032, 4
      %v1605 = vsel %vm1034, 0.0, %v1604
      %v1607 = vunpack.c.l.s4 1983009808
      %v1608 = vunpack.c.0.s8 %v1607
      %v1609 = vperm.slane %v1032, %v1608
      %v1611 = vunpack.c.l.s4 1983009808
      %v1612 = vunpack.c.0.s8 %v1611
      %v1613 = vperm.slane %v1605, %v1612
      %v1614 = vrot.slane %v1609, 4
      %v1615 = vsel %vm1034, 0.0, %v1614
      %v1617 = vunpack.c.l.s4 1934713408
      %v1618 = vunpack.c.0.s8 %v1617
      %v1619 = vperm.slane %v1609, %v1618
      %v1621 = vunpack.c.l.s4 1934713408
      %v1622 = vunpack.c.0.s8 %v1621
      %v1623 = vperm.slane %v1615, %v1622
      %v1624 = vrot.slane %v1613, 4
      %v1625 = vsel %vm1034, 0.0, %v1624
      %v1627 = vunpack.c.l.s4 1934713408
      %v1628 = vunpack.c.0.s8 %v1627
      %v1629 = vperm.slane %v1613, %v1628
      %v1631 = vunpack.c.l.s4 1934713408
      %v1632 = vunpack.c.0.s8 %v1631
      %v1633 = vperm.slane %v1625, %v1632
      %v1634 = vrot.slane %v1619, 4
      %v1635 = vsel %vm1034, 0.0, %v1634
      %v1636 = vrot.slane %v1623, 4
      %v1637 = vsel %vm1034, 0.0, %v1636
      %v1638 = vrot.slane %v1629, 4
      %v1639 = vsel %vm1034, 0.0, %v1638
      %v1640 = vrot.slane %v1633, 4
      %v1641 = vsel %vm1034, 0.0, %v1640
      %1650 = vrot.lane.b32.xlu0 %v1065, 8
      %v1651 = vpop.permute.xlu0 %1650
      %1652 = vrot.lane.b32.xlu0 %v1141, 8
      %v1653 = vpop.permute.xlu0 %1652
      %1654 = vrot.lane.b32.xlu0 %v1217, 8
      %v1655 = vpop.permute.xlu0 %1654
      %1656 = vrot.lane.b32.xlu0 %v1293, 8
      %v1657 = vpop.permute.xlu0 %1656
      %1658 = vrot.lane.b32.xlu0 %v1369, 8
      %v1659 = vpop.permute.xlu0 %1658
      %1660 = vrot.lane.b32.xlu0 %v1445, 8
      %v1661 = vpop.permute.xlu0 %1660
      %1662 = vrot.lane.b32.xlu0 %v1521, 8
      %v1663 = vpop.permute.xlu0 %1662
      %1664 = vrot.lane.b32.xlu0 %v1597, 8
      %v1665 = vpop.permute.xlu0 %1664
      %1682 = vrot.lane.b32.xlu0 %v1053, 16
      %v1683 = vpop.permute.xlu0 %1682
      %1684 = vrot.lane.b32.xlu0 %v1129, 16
      %v1685 = vpop.permute.xlu0 %1684
      %1686 = vrot.lane.b32.xlu0 %v1205, 16
      %v1687 = vpop.permute.xlu0 %1686
      %1688 = vrot.lane.b32.xlu0 %v1281, 16
      %v1689 = vpop.permute.xlu0 %1688
      %1690 = vrot.lane.b32.xlu0 %v1357, 16
      %v1691 = vpop.permute.xlu0 %1690
      %1692 = vrot.lane.b32.xlu0 %v1433, 16
      %v1693 = vpop.permute.xlu0 %1692
      %1694 = vrot.lane.b32.xlu0 %v1509, 16
      %v1695 = vpop.permute.xlu0 %1694
      %1696 = vrot.lane.b32.xlu0 %v1585, 16
      %v1697 = vpop.permute.xlu0 %1696
      %1714 = vrot.lane.b32.xlu0 %v1067, 24
      %v1715 = vpop.permute.xlu0 %1714
      %1716 = vrot.lane.b32.xlu0 %v1143, 24
      %v1717 = vpop.permute.xlu0 %1716
      %1718 = vrot.lane.b32.xlu0 %v1219, 24
      %v1719 = vpop.permute.xlu0 %1718
      %1720 = vrot.lane.b32.xlu0 %v1295, 24
      %v1721 = vpop.permute.xlu0 %1720
      %1722 = vrot.lane.b32.xlu0 %v1371, 24
      %v1723 = vpop.permute.xlu0 %1722
      %1724 = vrot.lane.b32.xlu0 %v1447, 24
      %v1725 = vpop.permute.xlu0 %1724
      %1726 = vrot.lane.b32.xlu0 %v1523, 24
      %v1727 = vpop.permute.xlu0 %1726
      %1728 = vrot.lane.b32.xlu0 %v1599, 24
      %v1729 = vpop.permute.xlu0 %1728
      %1746 = vrot.lane.b32.xlu0 %v1059, 32
      %v1747 = vpop.permute.xlu0 %1746
      %1748 = vrot.lane.b32.xlu0 %v1135, 32
      %v1749 = vpop.permute.xlu0 %1748
      %1750 = vrot.lane.b32.xlu0 %v1211, 32
      %v1751 = vpop.permute.xlu0 %1750
      %1752 = vrot.lane.b32.xlu0 %v1287, 32
      %v1753 = vpop.permute.xlu0 %1752
      %1754 = vrot.lane.b32.xlu0 %v1363, 32
      %v1755 = vpop.permute.xlu0 %1754
      %1756 = vrot.lane.b32.xlu0 %v1439, 32
      %v1757 = vpop.permute.xlu0 %1756
      %1758 = vrot.lane.b32.xlu0 %v1515, 32
      %v1759 = vpop.permute.xlu0 %1758
      %1760 = vrot.lane.b32.xlu0 %v1591, 32
      %v1761 = vpop.permute.xlu0 %1760
      %1778 = vrot.lane.b32.xlu0 %v1069, 40
      %v1779 = vpop.permute.xlu0 %1778
      %1780 = vrot.lane.b32.xlu0 %v1145, 40
      %v1781 = vpop.permute.xlu0 %1780
      %1782 = vrot.lane.b32.xlu0 %v1221, 40
      %v1783 = vpop.permute.xlu0 %1782
      %1784 = vrot.lane.b32.xlu0 %v1297, 40
      %v1785 = vpop.permute.xlu0 %1784
      %1786 = vrot.lane.b32.xlu0 %v1373, 40
      %v1787 = vpop.permute.xlu0 %1786
      %1788 = vrot.lane.b32.xlu0 %v1449, 40
      %v1789 = vpop.permute.xlu0 %1788
      %1790 = vrot.lane.b32.xlu0 %v1525, 40
      %v1791 = vpop.permute.xlu0 %1790
      %1792 = vrot.lane.b32.xlu0 %v1601, 40
      %v1793 = vpop.permute.xlu0 %1792
      %1810 = vrot.lane.b32.xlu0 %v1063, 48
      %v1811 = vpop.permute.xlu0 %1810
      %1812 = vrot.lane.b32.xlu0 %v1139, 48
      %v1813 = vpop.permute.xlu0 %1812
      %1814 = vrot.lane.b32.xlu0 %v1215, 48
      %v1815 = vpop.permute.xlu0 %1814
      %1816 = vrot.lane.b32.xlu0 %v1291, 48
      %v1817 = vpop.permute.xlu0 %1816
      %1818 = vrot.lane.b32.xlu0 %v1367, 48
      %v1819 = vpop.permute.xlu0 %1818
      %1820 = vrot.lane.b32.xlu0 %v1443, 48
      %v1821 = vpop.permute.xlu0 %1820
      %1822 = vrot.lane.b32.xlu0 %v1519, 48
      %v1823 = vpop.permute.xlu0 %1822
      %1824 = vrot.lane.b32.xlu0 %v1595, 48
      %v1825 = vpop.permute.xlu0 %1824
      %1842 = vrot.lane.b32.xlu0 %v1071, 56
      %v1843 = vpop.permute.xlu0 %1842
      %1844 = vrot.lane.b32.xlu0 %v1147, 56
      %v1845 = vpop.permute.xlu0 %1844
      %1846 = vrot.lane.b32.xlu0 %v1223, 56
      %v1847 = vpop.permute.xlu0 %1846
      %1848 = vrot.lane.b32.xlu0 %v1299, 56
      %v1849 = vpop.permute.xlu0 %1848
      %1850 = vrot.lane.b32.xlu0 %v1375, 56
      %v1851 = vpop.permute.xlu0 %1850
      %1852 = vrot.lane.b32.xlu0 %v1451, 56
      %v1853 = vpop.permute.xlu0 %1852
      %1854 = vrot.lane.b32.xlu0 %v1527, 56
      %v1855 = vpop.permute.xlu0 %1854
      %1856 = vrot.lane.b32.xlu0 %v1603, 56
      %v1857 = vpop.permute.xlu0 %1856
      %1874 = vrot.lane.b32.xlu0 %v1087, 64
      %v1875 = vpop.permute.xlu0 %1874
      %1876 = vrot.lane.b32.xlu0 %v1163, 64
      %v1877 = vpop.permute.xlu0 %1876
      %1878 = vrot.lane.b32.xlu0 %v1239, 64
      %v1879 = vpop.permute.xlu0 %1878
      %1880 = vrot.lane.b32.xlu0 %v1315, 64
      %v1881 = vpop.permute.xlu0 %1880
      %1882 = vrot.lane.b32.xlu0 %v1391, 64
      %v1883 = vpop.permute.xlu0 %1882
      %1884 = vrot.lane.b32.xlu0 %v1467, 64
      %v1885 = vpop.permute.xlu0 %1884
      %1886 = vrot.lane.b32.xlu0 %v1543, 64
      %v1887 = vpop.permute.xlu0 %1886
      %1888 = vrot.lane.b32.xlu0 %v1619, 64
      %v1889 = vpop.permute.xlu0 %1888
      %1906 = vrot.lane.b32.xlu0 %v1103, 72
      %v1907 = vpop.permute.xlu0 %1906
      %1908 = vrot.lane.b32.xlu0 %v1179, 72
      %v1909 = vpop.permute.xlu0 %1908
      %1910 = vrot.lane.b32.xlu0 %v1255, 72
      %v1911 = vpop.permute.xlu0 %1910
      %1912 = vrot.lane.b32.xlu0 %v1331, 72
      %v1913 = vpop.permute.xlu0 %1912
      %1914 = vrot.lane.b32.xlu0 %v1407, 72
      %v1915 = vpop.permute.xlu0 %1914
      %1916 = vrot.lane.b32.xlu0 %v1483, 72
      %v1917 = vpop.permute.xlu0 %1916
      %1918 = vrot.lane.b32.xlu0 %v1559, 72
      %v1919 = vpop.permute.xlu0 %1918
      %1920 = vrot.lane.b32.xlu0 %v1635, 72
      %v1921 = vpop.permute.xlu0 %1920
      %1938 = vrot.lane.b32.xlu0 %v1091, 80
      %v1939 = vpop.permute.xlu0 %1938
      %1940 = vrot.lane.b32.xlu0 %v1167, 80
      %v1941 = vpop.permute.xlu0 %1940
      %1942 = vrot.lane.b32.xlu0 %v1243, 80
      %v1943 = vpop.permute.xlu0 %1942
      %1944 = vrot.lane.b32.xlu0 %v1319, 80
      %v1945 = vpop.permute.xlu0 %1944
      %1946 = vrot.lane.b32.xlu0 %v1395, 80
      %v1947 = vpop.permute.xlu0 %1946
      %1948 = vrot.lane.b32.xlu0 %v1471, 80
      %v1949 = vpop.permute.xlu0 %1948
      %1950 = vrot.lane.b32.xlu0 %v1547, 80
      %v1951 = vpop.permute.xlu0 %1950
      %1952 = vrot.lane.b32.xlu0 %v1623, 80
      %v1953 = vpop.permute.xlu0 %1952
      %1970 = vrot.lane.b32.xlu0 %v1105, 88
      %v1971 = vpop.permute.xlu0 %1970
      %1972 = vrot.lane.b32.xlu0 %v1181, 88
      %v1973 = vpop.permute.xlu0 %1972
      %1974 = vrot.lane.b32.xlu0 %v1257, 88
      %v1975 = vpop.permute.xlu0 %1974
      %1976 = vrot.lane.b32.xlu0 %v1333, 88
      %v1977 = vpop.permute.xlu0 %1976
      %1978 = vrot.lane.b32.xlu0 %v1409, 88
      %v1979 = vpop.permute.xlu0 %1978
      %1980 = vrot.lane.b32.xlu0 %v1485, 88
      %v1981 = vpop.permute.xlu0 %1980
      %1982 = vrot.lane.b32.xlu0 %v1561, 88
      %v1983 = vpop.permute.xlu0 %1982
      %1984 = vrot.lane.b32.xlu0 %v1637, 88
      %v1985 = vpop.permute.xlu0 %1984
      %2002 = vrot.lane.b32.xlu0 %v1097, 96
      %v2003 = vpop.permute.xlu0 %2002
      %2004 = vrot.lane.b32.xlu0 %v1173, 96
      %v2005 = vpop.permute.xlu0 %2004
      %2006 = vrot.lane.b32.xlu0 %v1249, 96
      %v2007 = vpop.permute.xlu0 %2006
      %2008 = vrot.lane.b32.xlu0 %v1325, 96
      %v2009 = vpop.permute.xlu0 %2008
      %2010 = vrot.lane.b32.xlu0 %v1401, 96
      %v2011 = vpop.permute.xlu0 %2010
      %2012 = vrot.lane.b32.xlu0 %v1477, 96
      %v2013 = vpop.permute.xlu0 %2012
      %2014 = vrot.lane.b32.xlu0 %v1553, 96
      %v2015 = vpop.permute.xlu0 %2014
      %2016 = vrot.lane.b32.xlu0 %v1629, 96
      %v2017 = vpop.permute.xlu0 %2016
      %2034 = vrot.lane.b32.xlu0 %v1107, 104
      %v2035 = vpop.permute.xlu0 %2034
      %2036 = vrot.lane.b32.xlu0 %v1183, 104
      %v2037 = vpop.permute.xlu0 %2036
      %2038 = vrot.lane.b32.xlu0 %v1259, 104
      %v2039 = vpop.permute.xlu0 %2038
      %2040 = vrot.lane.b32.xlu0 %v1335, 104
      %v2041 = vpop.permute.xlu0 %2040
      %2042 = vrot.lane.b32.xlu0 %v1411, 104
      %v2043 = vpop.permute.xlu0 %2042
      %2044 = vrot.lane.b32.xlu0 %v1487, 104
      %v2045 = vpop.permute.xlu0 %2044
      %2046 = vrot.lane.b32.xlu0 %v1563, 104
      %v2047 = vpop.permute.xlu0 %2046
      %2048 = vrot.lane.b32.xlu0 %v1639, 104
      %v2049 = vpop.permute.xlu0 %2048
      %2066 = vrot.lane.b32.xlu0 %v1101, 112
      %v2067 = vpop.permute.xlu0 %2066
      %2068 = vrot.lane.b32.xlu0 %v1177, 112
      %v2069 = vpop.permute.xlu0 %2068
      %2070 = vrot.lane.b32.xlu0 %v1253, 112
      %v2071 = vpop.permute.xlu0 %2070
      %2072 = vrot.lane.b32.xlu0 %v1329, 112
      %v2073 = vpop.permute.xlu0 %2072
      %2074 = vrot.lane.b32.xlu0 %v1405, 112
      %v2075 = vpop.permute.xlu0 %2074
      %2076 = vrot.lane.b32.xlu0 %v1481, 112
      %v2077 = vpop.permute.xlu0 %2076
      %2078 = vrot.lane.b32.xlu0 %v1557, 112
      %v2079 = vpop.permute.xlu0 %2078
      %2080 = vrot.lane.b32.xlu0 %v1633, 112
      %v2081 = vpop.permute.xlu0 %2080
      %2098 = vrot.lane.b32.xlu0 %v1109, 120
      %v2099 = vpop.permute.xlu0 %2098
      %2100 = vrot.lane.b32.xlu0 %v1185, 120
      %v2101 = vpop.permute.xlu0 %2100
      %2102 = vrot.lane.b32.xlu0 %v1261, 120
      %v2103 = vpop.permute.xlu0 %2102
      %2104 = vrot.lane.b32.xlu0 %v1337, 120
      %v2105 = vpop.permute.xlu0 %2104
      %2106 = vrot.lane.b32.xlu0 %v1413, 120
      %v2107 = vpop.permute.xlu0 %2106
      %2108 = vrot.lane.b32.xlu0 %v1489, 120
      %v2109 = vpop.permute.xlu0 %2108
      %2110 = vrot.lane.b32.xlu0 %v1565, 120
      %v2111 = vpop.permute.xlu0 %2110
      %2112 = vrot.lane.b32.xlu0 %v1641, 120
      %v2113 = vpop.permute.xlu0 %2112
      %v2122 = vsel %vm771, %v1049, %v1651
      %v2123 = vsel %vm771, %v1125, %v1653
      %v2124 = vsel %vm771, %v1201, %v1655
      %v2125 = vsel %vm771, %v1277, %v1657
      %v2126 = vsel %vm771, %v1353, %v1659
      %v2127 = vsel %vm771, %v1429, %v1661
      %v2128 = vsel %vm771, %v1505, %v1663
      %v2129 = vsel %vm771, %v1581, %v1665
      %v2130 = vsel %vm805, %v2122, %v1683
      %v2131 = vsel %vm805, %v2123, %v1685
      %v2132 = vsel %vm805, %v2124, %v1687
      %v2133 = vsel %vm805, %v2125, %v1689
      %v2134 = vsel %vm805, %v2126, %v1691
      %v2135 = vsel %vm805, %v2127, %v1693
      %v2136 = vsel %vm805, %v2128, %v1695
      %v2137 = vsel %vm805, %v2129, %v1697
      %v2138 = vsel %vm839, %v2130, %v1715
      %v2139 = vsel %vm839, %v2131, %v1717
      %v2140 = vsel %vm839, %v2132, %v1719
      %v2141 = vsel %vm839, %v2133, %v1721
      %v2142 = vsel %vm839, %v2134, %v1723
      %v2143 = vsel %vm839, %v2135, %v1725
      %v2144 = vsel %vm839, %v2136, %v1727
      %v2145 = vsel %vm839, %v2137, %v1729
      %v2146 = vsel %vm873, %v2138, %v1747
      %v2147 = vsel %vm873, %v2139, %v1749
      %v2148 = vsel %vm873, %v2140, %v1751
      %v2149 = vsel %vm873, %v2141, %v1753
      %v2150 = vsel %vm873, %v2142, %v1755
      %v2151 = vsel %vm873, %v2143, %v1757
      %v2152 = vsel %vm873, %v2144, %v1759
      %v2153 = vsel %vm873, %v2145, %v1761
      %vm2154 = vcmask 326656
      %v2155 = vsel %vm2154, %v2146, %v1779
      %v2156 = vsel %vm2154, %v2147, %v1781
      %v2157 = vsel %vm2154, %v2148, %v1783
      %v2158 = vsel %vm2154, %v2149, %v1785
      %v2159 = vsel %vm2154, %v2150, %v1787
      %v2160 = vsel %vm2154, %v2151, %v1789
      %v2161 = vsel %vm2154, %v2152, %v1791
      %v2162 = vsel %vm2154, %v2153, %v1793
      %vm2163 = vcmask 392192
      %v2164 = vsel %vm2163, %v2155, %v1811
      %v2165 = vsel %vm2163, %v2156, %v1813
      %v2166 = vsel %vm2163, %v2157, %v1815
      %v2167 = vsel %vm2163, %v2158, %v1817
      %v2168 = vsel %vm2163, %v2159, %v1819
      %v2169 = vsel %vm2163, %v2160, %v1821
      %v2170 = vsel %vm2163, %v2161, %v1823
      %v2171 = vsel %vm2163, %v2162, %v1825
      %vm2172 = vcmask 457728
      %v2173 = vsel %vm2172, %v2164, %v1843
      %v2174 = vsel %vm2172, %v2165, %v1845
      %v2175 = vsel %vm2172, %v2166, %v1847
      %v2176 = vsel %vm2172, %v2167, %v1849
      %v2177 = vsel %vm2172, %v2168, %v1851
      %v2178 = vsel %vm2172, %v2169, %v1853
      %v2179 = vsel %vm2172, %v2170, %v1855
      %v2180 = vsel %vm2172, %v2171, %v1857
      %vm2181 = vcmask 523264
      %v2182 = vsel %vm2181, %v2173, %v1875
      %v2183 = vsel %vm2181, %v2174, %v1877
      %v2184 = vsel %vm2181, %v2175, %v1879
      %v2185 = vsel %vm2181, %v2176, %v1881
      %v2186 = vsel %vm2181, %v2177, %v1883
      %v2187 = vsel %vm2181, %v2178, %v1885
      %v2188 = vsel %vm2181, %v2179, %v1887
      %v2189 = vsel %vm2181, %v2180, %v1889
      %vm2190 = vcmask 588800
      %v2191 = vsel %vm2190, %v2182, %v1907
      %v2192 = vsel %vm2190, %v2183, %v1909
      %v2193 = vsel %vm2190, %v2184, %v1911
      %v2194 = vsel %vm2190, %v2185, %v1913
      %v2195 = vsel %vm2190, %v2186, %v1915
      %v2196 = vsel %vm2190, %v2187, %v1917
      %v2197 = vsel %vm2190, %v2188, %v1919
      %v2198 = vsel %vm2190, %v2189, %v1921
      %vm2199 = vcmask 654336
      %v2200 = vsel %vm2199, %v2191, %v1939
      %v2201 = vsel %vm2199, %v2192, %v1941
      %v2202 = vsel %vm2199, %v2193, %v1943
      %v2203 = vsel %vm2199, %v2194, %v1945
      %v2204 = vsel %vm2199, %v2195, %v1947
      %v2205 = vsel %vm2199, %v2196, %v1949
      %v2206 = vsel %vm2199, %v2197, %v1951
      %v2207 = vsel %vm2199, %v2198, %v1953
      %vm2208 = vcmask 719872
      %v2209 = vsel %vm2208, %v2200, %v1971
      %v2210 = vsel %vm2208, %v2201, %v1973
      %v2211 = vsel %vm2208, %v2202, %v1975
      %v2212 = vsel %vm2208, %v2203, %v1977
      %v2213 = vsel %vm2208, %v2204, %v1979
      %v2214 = vsel %vm2208, %v2205, %v1981
      %v2215 = vsel %vm2208, %v2206, %v1983
      %v2216 = vsel %vm2208, %v2207, %v1985
      %vm2217 = vcmask 785408
      %v2218 = vsel %vm2217, %v2209, %v2003
      %v2219 = vsel %vm2217, %v2210, %v2005
      %v2220 = vsel %vm2217, %v2211, %v2007
      %v2221 = vsel %vm2217, %v2212, %v2009
      %v2222 = vsel %vm2217, %v2213, %v2011
      %v2223 = vsel %vm2217, %v2214, %v2013
      %v2224 = vsel %vm2217, %v2215, %v2015
      %v2225 = vsel %vm2217, %v2216, %v2017
      %vm2226 = vcmask 850944
      %v2227 = vsel %vm2226, %v2218, %v2035
      %v2228 = vsel %vm2226, %v2219, %v2037
      %v2229 = vsel %vm2226, %v2220, %v2039
      %v2230 = vsel %vm2226, %v2221, %v2041
      %v2231 = vsel %vm2226, %v2222, %v2043
      %v2232 = vsel %vm2226, %v2223, %v2045
      %v2233 = vsel %vm2226, %v2224, %v2047
      %v2234 = vsel %vm2226, %v2225, %v2049
      %vm2235 = vcmask 916480
      %v2236 = vsel %vm2235, %v2227, %v2067
      %v2237 = vsel %vm2235, %v2228, %v2069
      %v2238 = vsel %vm2235, %v2229, %v2071
      %v2239 = vsel %vm2235, %v2230, %v2073
      %v2240 = vsel %vm2235, %v2231, %v2075
      %v2241 = vsel %vm2235, %v2232, %v2077
      %v2242 = vsel %vm2235, %v2233, %v2079
      %v2243 = vsel %vm2235, %v2234, %v2081
      %vm2244 = vcmask 982016
      %v2245 = vsel %vm2244, %v2236, %v2099
      %v2246 = vsel %vm2244, %v2237, %v2101
      %v2247 = vsel %vm2244, %v2238, %v2103
      %v2248 = vsel %vm2244, %v2239, %v2105
      %v2249 = vsel %vm2244, %v2240, %v2107
      %v2250 = vsel %vm2244, %v2241, %v2109
      %v2251 = vsel %vm2244, %v2242, %v2111
      %v2252 = vsel %vm2244, %v2243, %v2113
      %2269 = vrot.lane.b32.xlu0 %v1017, 120
      %v2270 = vpop.permute.xlu0 %2269
      %2271 = vrot.lane.b32.xlu0 %v1018, 120
      %v2272 = vpop.permute.xlu0 %2271
      %2273 = vrot.lane.b32.xlu0 %v1019, 120
      %v2274 = vpop.permute.xlu0 %2273
      %2275 = vrot.lane.b32.xlu0 %v1020, 120
      %v2276 = vpop.permute.xlu0 %2275
      %2277 = vrot.lane.b32.xlu0 %v1021, 120
      %v2278 = vpop.permute.xlu0 %2277
      %2279 = vrot.lane.b32.xlu0 %v1022, 120
      %v2280 = vpop.permute.xlu0 %2279
      %2281 = vrot.lane.b32.xlu0 %v1023, 120
      %v2282 = vpop.permute.xlu0 %2281
      %2283 = vrot.lane.b32.xlu0 %v1024, 120
      %v2284 = vpop.permute.xlu0 %2283
      %2285 = vrot.lane.b32.xlu0 %v1025, 120
      %v2286 = vpop.permute.xlu0 %2285
      %2287 = vrot.lane.b32.xlu0 %v1026, 120
      %v2288 = vpop.permute.xlu0 %2287
      %2289 = vrot.lane.b32.xlu0 %v1027, 120
      %v2290 = vpop.permute.xlu0 %2289
      %2291 = vrot.lane.b32.xlu0 %v1028, 120
      %v2292 = vpop.permute.xlu0 %2291
      %2293 = vrot.lane.b32.xlu0 %v1029, 120
      %v2294 = vpop.permute.xlu0 %2293
      %2295 = vrot.lane.b32.xlu0 %v1030, 120
      %v2296 = vpop.permute.xlu0 %2295
      %2297 = vrot.lane.b32.xlu0 %v1031, 120
      %v2298 = vpop.permute.xlu0 %2297
      %2299 = vrot.lane.b32.xlu0 %v1032, 120
      %v2300 = vpop.permute.xlu0 %2299
      %v2317 = vrot.slane %v2270, 4
      %v2318 = vsel %vm1034, 0.0, %v2317
      %v2320 = vunpack.c.l.s4 1983009808
      %v2321 = vunpack.c.0.s8 %v2320
      %v2322 = vperm.slane %v2270, %v2321
      %v2324 = vunpack.c.l.s4 1983009808
      %v2325 = vunpack.c.0.s8 %v2324
      %v2326 = vperm.slane %v2318, %v2325
      %v2327 = vrot.slane %v2322, 4
      %v2328 = vsel %vm1034, 0.0, %v2327
      %v2330 = vunpack.c.l.s4 1934713408
      %v2331 = vunpack.c.0.s8 %v2330
      %v2332 = vperm.slane %v2322, %v2331
      %v2334 = vunpack.c.l.s4 1934713408
      %v2335 = vunpack.c.0.s8 %v2334
      %v2336 = vperm.slane %v2328, %v2335
      %v2337 = vrot.slane %v2326, 4
      %v2338 = vsel %vm1034, 0.0, %v2337
      %v2340 = vunpack.c.l.s4 1934713408
      %v2341 = vunpack.c.0.s8 %v2340
      %v2342 = vperm.slane %v2326, %v2341
      %v2344 = vunpack.c.l.s4 1934713408
      %v2345 = vunpack.c.0.s8 %v2344
      %v2346 = vperm.slane %v2338, %v2345
      %v2347 = vrot.slane %v2332, 4
      %v2348 = vsel %vm1034, 0.0, %v2347
      %v2349 = vrot.slane %v2336, 4
      %v2350 = vsel %vm1034, 0.0, %v2349
      %v2351 = vrot.slane %v2342, 4
      %v2352 = vsel %vm1034, 0.0, %v2351
      %v2353 = vrot.slane %v2346, 4
      %v2354 = vsel %vm1034, 0.0, %v2353
      %v2355 = vrot.slane %v2272, 4
      %v2356 = vsel %vm1034, 0.0, %v2355
      %v2358 = vunpack.c.l.s4 1983009808
      %v2359 = vunpack.c.0.s8 %v2358
      %v2360 = vperm.slane %v2272, %v2359
      %v2362 = vunpack.c.l.s4 1983009808
      %v2363 = vunpack.c.0.s8 %v2362
      %v2364 = vperm.slane %v2356, %v2363
      %v2365 = vrot.slane %v2360, 4
      %v2366 = vsel %vm1034, 0.0, %v2365
      %v2368 = vunpack.c.l.s4 1934713408
      %v2369 = vunpack.c.0.s8 %v2368
      %v2370 = vperm.slane %v2360, %v2369
      %v2372 = vunpack.c.l.s4 1934713408
      %v2373 = vunpack.c.0.s8 %v2372
      %v2374 = vperm.slane %v2366, %v2373
      %v2375 = vrot.slane %v2364, 4
      %v2376 = vsel %vm1034, 0.0, %v2375
      %v2378 = vunpack.c.l.s4 1934713408
      %v2379 = vunpack.c.0.s8 %v2378
      %v2380 = vperm.slane %v2364, %v2379
      %v2382 = vunpack.c.l.s4 1934713408
      %v2383 = vunpack.c.0.s8 %v2382
      %v2384 = vperm.slane %v2376, %v2383
      %v2385 = vrot.slane %v2370, 4
      %v2386 = vsel %vm1034, 0.0, %v2385
      %v2387 = vrot.slane %v2374, 4
      %v2388 = vsel %vm1034, 0.0, %v2387
      %v2389 = vrot.slane %v2380, 4
      %v2390 = vsel %vm1034, 0.0, %v2389
      %v2391 = vrot.slane %v2384, 4
      %v2392 = vsel %vm1034, 0.0, %v2391
      %v2393 = vrot.slane %v2274, 4
      %v2394 = vsel %vm1034, 0.0, %v2393
      %v2396 = vunpack.c.l.s4 1983009808
      %v2397 = vunpack.c.0.s8 %v2396
      %v2398 = vperm.slane %v2274, %v2397
      %v2400 = vunpack.c.l.s4 1983009808
      %v2401 = vunpack.c.0.s8 %v2400
      %v2402 = vperm.slane %v2394, %v2401
      %v2403 = vrot.slane %v2398, 4
      %v2404 = vsel %vm1034, 0.0, %v2403
      %v2406 = vunpack.c.l.s4 1934713408
      %v2407 = vunpack.c.0.s8 %v2406
      %v2408 = vperm.slane %v2398, %v2407
      %v2410 = vunpack.c.l.s4 1934713408
      %v2411 = vunpack.c.0.s8 %v2410
      %v2412 = vperm.slane %v2404, %v2411
      %v2413 = vrot.slane %v2402, 4
      %v2414 = vsel %vm1034, 0.0, %v2413
      %v2416 = vunpack.c.l.s4 1934713408
      %v2417 = vunpack.c.0.s8 %v2416
      %v2418 = vperm.slane %v2402, %v2417
      %v2420 = vunpack.c.l.s4 1934713408
      %v2421 = vunpack.c.0.s8 %v2420
      %v2422 = vperm.slane %v2414, %v2421
      %v2423 = vrot.slane %v2408, 4
      %v2424 = vsel %vm1034, 0.0, %v2423
      %v2425 = vrot.slane %v2412, 4
      %v2426 = vsel %vm1034, 0.0, %v2425
      %v2427 = vrot.slane %v2418, 4
      %v2428 = vsel %vm1034, 0.0, %v2427
      %v2429 = vrot.slane %v2422, 4
      %v2430 = vsel %vm1034, 0.0, %v2429
      %v2431 = vrot.slane %v2276, 4
      %v2432 = vsel %vm1034, 0.0, %v2431
      %v2434 = vunpack.c.l.s4 1983009808
      %v2435 = vunpack.c.0.s8 %v2434
      %v2436 = vperm.slane %v2276, %v2435
      %v2438 = vunpack.c.l.s4 1983009808
      %v2439 = vunpack.c.0.s8 %v2438
      %v2440 = vperm.slane %v2432, %v2439
      %v2441 = vrot.slane %v2436, 4
      %v2442 = vsel %vm1034, 0.0, %v2441
      %v2444 = vunpack.c.l.s4 1934713408
      %v2445 = vunpack.c.0.s8 %v2444
      %v2446 = vperm.slane %v2436, %v2445
      %v2448 = vunpack.c.l.s4 1934713408
      %v2449 = vunpack.c.0.s8 %v2448
      %v2450 = vperm.slane %v2442, %v2449
      %v2451 = vrot.slane %v2440, 4
      %v2452 = vsel %vm1034, 0.0, %v2451
      %v2454 = vunpack.c.l.s4 1934713408
      %v2455 = vunpack.c.0.s8 %v2454
      %v2456 = vperm.slane %v2440, %v2455
      %v2458 = vunpack.c.l.s4 1934713408
      %v2459 = vunpack.c.0.s8 %v2458
      %v2460 = vperm.slane %v2452, %v2459
      %v2461 = vrot.slane %v2446, 4
      %v2462 = vsel %vm1034, 0.0, %v2461
      %v2463 = vrot.slane %v2450, 4
      %v2464 = vsel %vm1034, 0.0, %v2463
      %v2465 = vrot.slane %v2456, 4
      %v2466 = vsel %vm1034, 0.0, %v2465
      %v2467 = vrot.slane %v2460, 4
      %v2468 = vsel %vm1034, 0.0, %v2467
      %v2469 = vrot.slane %v2278, 4
      %v2470 = vsel %vm1034, 0.0, %v2469
      %v2472 = vunpack.c.l.s4 1983009808
      %v2473 = vunpack.c.0.s8 %v2472
      %v2474 = vperm.slane %v2278, %v2473
      %v2476 = vunpack.c.l.s4 1983009808
      %v2477 = vunpack.c.0.s8 %v2476
      %v2478 = vperm.slane %v2470, %v2477
      %v2479 = vrot.slane %v2474, 4
      %v2480 = vsel %vm1034, 0.0, %v2479
      %v2482 = vunpack.c.l.s4 1934713408
      %v2483 = vunpack.c.0.s8 %v2482
      %v2484 = vperm.slane %v2474, %v2483
      %v2486 = vunpack.c.l.s4 1934713408
      %v2487 = vunpack.c.0.s8 %v2486
      %v2488 = vperm.slane %v2480, %v2487
      %v2489 = vrot.slane %v2478, 4
      %v2490 = vsel %vm1034, 0.0, %v2489
      %v2492 = vunpack.c.l.s4 1934713408
      %v2493 = vunpack.c.0.s8 %v2492
      %v2494 = vperm.slane %v2478, %v2493
      %v2496 = vunpack.c.l.s4 1934713408
      %v2497 = vunpack.c.0.s8 %v2496
      %v2498 = vperm.slane %v2490, %v2497
      %v2499 = vrot.slane %v2484, 4
      %v2500 = vsel %vm1034, 0.0, %v2499
      %v2501 = vrot.slane %v2488, 4
      %v2502 = vsel %vm1034, 0.0, %v2501
      %v2503 = vrot.slane %v2494, 4
      %v2504 = vsel %vm1034, 0.0, %v2503
      %v2505 = vrot.slane %v2498, 4
      %v2506 = vsel %vm1034, 0.0, %v2505
      %v2507 = vrot.slane %v2280, 4
      %v2508 = vsel %vm1034, 0.0, %v2507
      %v2510 = vunpack.c.l.s4 1983009808
      %v2511 = vunpack.c.0.s8 %v2510
      %v2512 = vperm.slane %v2280, %v2511
      %v2514 = vunpack.c.l.s4 1983009808
      %v2515 = vunpack.c.0.s8 %v2514
      %v2516 = vperm.slane %v2508, %v2515
      %v2517 = vrot.slane %v2512, 4
      %v2518 = vsel %vm1034, 0.0, %v2517
      %v2520 = vunpack.c.l.s4 1934713408
      %v2521 = vunpack.c.0.s8 %v2520
      %v2522 = vperm.slane %v2512, %v2521
      %v2524 = vunpack.c.l.s4 1934713408
      %v2525 = vunpack.c.0.s8 %v2524
      %v2526 = vperm.slane %v2518, %v2525
      %v2527 = vrot.slane %v2516, 4
      %v2528 = vsel %vm1034, 0.0, %v2527
      %v2530 = vunpack.c.l.s4 1934713408
      %v2531 = vunpack.c.0.s8 %v2530
      %v2532 = vperm.slane %v2516, %v2531
      %v2534 = vunpack.c.l.s4 1934713408
      %v2535 = vunpack.c.0.s8 %v2534
      %v2536 = vperm.slane %v2528, %v2535
      %v2537 = vrot.slane %v2522, 4
      %v2538 = vsel %vm1034, 0.0, %v2537
      %v2539 = vrot.slane %v2526, 4
      %v2540 = vsel %vm1034, 0.0, %v2539
      %v2541 = vrot.slane %v2532, 4
      %v2542 = vsel %vm1034, 0.0, %v2541
      %v2543 = vrot.slane %v2536, 4
      %v2544 = vsel %vm1034, 0.0, %v2543
      %v2545 = vrot.slane %v2282, 4
      %v2546 = vsel %vm1034, 0.0, %v2545
      %v2548 = vunpack.c.l.s4 1983009808
      %v2549 = vunpack.c.0.s8 %v2548
      %v2550 = vperm.slane %v2282, %v2549
      %v2552 = vunpack.c.l.s4 1983009808
      %v2553 = vunpack.c.0.s8 %v2552
      %v2554 = vperm.slane %v2546, %v2553
      %v2555 = vrot.slane %v2550, 4
      %v2556 = vsel %vm1034, 0.0, %v2555
      %v2558 = vunpack.c.l.s4 1934713408
      %v2559 = vunpack.c.0.s8 %v2558
      %v2560 = vperm.slane %v2550, %v2559
      %v2562 = vunpack.c.l.s4 1934713408
      %v2563 = vunpack.c.0.s8 %v2562
      %v2564 = vperm.slane %v2556, %v2563
      %v2565 = vrot.slane %v2554, 4
      %v2566 = vsel %vm1034, 0.0, %v2565
      %v2568 = vunpack.c.l.s4 1934713408
      %v2569 = vunpack.c.0.s8 %v2568
      %v2570 = vperm.slane %v2554, %v2569
      %v2572 = vunpack.c.l.s4 1934713408
      %v2573 = vunpack.c.0.s8 %v2572
      %v2574 = vperm.slane %v2566, %v2573
      %v2575 = vrot.slane %v2560, 4
      %v2576 = vsel %vm1034, 0.0, %v2575
      %v2577 = vrot.slane %v2564, 4
      %v2578 = vsel %vm1034, 0.0, %v2577
      %v2579 = vrot.slane %v2570, 4
      %v2580 = vsel %vm1034, 0.0, %v2579
      %v2581 = vrot.slane %v2574, 4
      %v2582 = vsel %vm1034, 0.0, %v2581
      %v2583 = vrot.slane %v2284, 4
      %v2584 = vsel %vm1034, 0.0, %v2583
      %v2586 = vunpack.c.l.s4 1983009808
      %v2587 = vunpack.c.0.s8 %v2586
      %v2588 = vperm.slane %v2284, %v2587
      %v2590 = vunpack.c.l.s4 1983009808
      %v2591 = vunpack.c.0.s8 %v2590
      %v2592 = vperm.slane %v2584, %v2591
      %v2593 = vrot.slane %v2588, 4
      %v2594 = vsel %vm1034, 0.0, %v2593
      %v2596 = vunpack.c.l.s4 1934713408
      %v2597 = vunpack.c.0.s8 %v2596
      %v2598 = vperm.slane %v2588, %v2597
      %v2600 = vunpack.c.l.s4 1934713408
      %v2601 = vunpack.c.0.s8 %v2600
      %v2602 = vperm.slane %v2594, %v2601
      %v2603 = vrot.slane %v2592, 4
      %v2604 = vsel %vm1034, 0.0, %v2603
      %v2606 = vunpack.c.l.s4 1934713408
      %v2607 = vunpack.c.0.s8 %v2606
      %v2608 = vperm.slane %v2592, %v2607
      %v2610 = vunpack.c.l.s4 1934713408
      %v2611 = vunpack.c.0.s8 %v2610
      %v2612 = vperm.slane %v2604, %v2611
      %v2613 = vrot.slane %v2598, 4
      %v2614 = vsel %vm1034, 0.0, %v2613
      %v2615 = vrot.slane %v2602, 4
      %v2616 = vsel %vm1034, 0.0, %v2615
      %v2617 = vrot.slane %v2608, 4
      %v2618 = vsel %vm1034, 0.0, %v2617
      %v2619 = vrot.slane %v2612, 4
      %v2620 = vsel %vm1034, 0.0, %v2619
      %v2621 = vrot.slane %v2286, 4
      %v2622 = vsel %vm1034, 0.0, %v2621
      %v2624 = vunpack.c.l.s4 1983009808
      %v2625 = vunpack.c.0.s8 %v2624
      %v2626 = vperm.slane %v2286, %v2625
      %v2628 = vunpack.c.l.s4 1983009808
      %v2629 = vunpack.c.0.s8 %v2628
      %v2630 = vperm.slane %v2622, %v2629
      %v2631 = vrot.slane %v2626, 4
      %v2632 = vsel %vm1034, 0.0, %v2631
      %v2634 = vunpack.c.l.s4 1934713408
      %v2635 = vunpack.c.0.s8 %v2634
      %v2636 = vperm.slane %v2626, %v2635
      %v2638 = vunpack.c.l.s4 1934713408
      %v2639 = vunpack.c.0.s8 %v2638
      %v2640 = vperm.slane %v2632, %v2639
      %v2641 = vrot.slane %v2630, 4
      %v2642 = vsel %vm1034, 0.0, %v2641
      %v2644 = vunpack.c.l.s4 1934713408
      %v2645 = vunpack.c.0.s8 %v2644
      %v2646 = vperm.slane %v2630, %v2645
      %v2648 = vunpack.c.l.s4 1934713408
      %v2649 = vunpack.c.0.s8 %v2648
      %v2650 = vperm.slane %v2642, %v2649
      %v2651 = vrot.slane %v2636, 4
      %v2652 = vsel %vm1034, 0.0, %v2651
      %v2653 = vrot.slane %v2640, 4
      %v2654 = vsel %vm1034, 0.0, %v2653
      %v2655 = vrot.slane %v2646, 4
      %v2656 = vsel %vm1034, 0.0, %v2655
      %v2657 = vrot.slane %v2650, 4
      %v2658 = vsel %vm1034, 0.0, %v2657
      %v2659 = vrot.slane %v2288, 4
      %v2660 = vsel %vm1034, 0.0, %v2659
      %v2662 = vunpack.c.l.s4 1983009808
      %v2663 = vunpack.c.0.s8 %v2662
      %v2664 = vperm.slane %v2288, %v2663
      %v2666 = vunpack.c.l.s4 1983009808
      %v2667 = vunpack.c.0.s8 %v2666
      %v2668 = vperm.slane %v2660, %v2667
      %v2669 = vrot.slane %v2664, 4
      %v2670 = vsel %vm1034, 0.0, %v2669
      %v2672 = vunpack.c.l.s4 1934713408
      %v2673 = vunpack.c.0.s8 %v2672
      %v2674 = vperm.slane %v2664, %v2673
      %v2676 = vunpack.c.l.s4 1934713408
      %v2677 = vunpack.c.0.s8 %v2676
      %v2678 = vperm.slane %v2670, %v2677
      %v2679 = vrot.slane %v2668, 4
      %v2680 = vsel %vm1034, 0.0, %v2679
      %v2682 = vunpack.c.l.s4 1934713408
      %v2683 = vunpack.c.0.s8 %v2682
      %v2684 = vperm.slane %v2668, %v2683
      %v2686 = vunpack.c.l.s4 1934713408
      %v2687 = vunpack.c.0.s8 %v2686
      %v2688 = vperm.slane %v2680, %v2687
      %v2689 = vrot.slane %v2674, 4
      %v2690 = vsel %vm1034, 0.0, %v2689
      %v2691 = vrot.slane %v2678, 4
      %v2692 = vsel %vm1034, 0.0, %v2691
      %v2693 = vrot.slane %v2684, 4
      %v2694 = vsel %vm1034, 0.0, %v2693
      %v2695 = vrot.slane %v2688, 4
      %v2696 = vsel %vm1034, 0.0, %v2695
      %v2697 = vrot.slane %v2290, 4
      %v2698 = vsel %vm1034, 0.0, %v2697
      %v2700 = vunpack.c.l.s4 1983009808
      %v2701 = vunpack.c.0.s8 %v2700
      %v2702 = vperm.slane %v2290, %v2701
      %v2704 = vunpack.c.l.s4 1983009808
      %v2705 = vunpack.c.0.s8 %v2704
      %v2706 = vperm.slane %v2698, %v2705
      %v2707 = vrot.slane %v2702, 4
      %v2708 = vsel %vm1034, 0.0, %v2707
      %v2710 = vunpack.c.l.s4 1934713408
      %v2711 = vunpack.c.0.s8 %v2710
      %v2712 = vperm.slane %v2702, %v2711
      %v2714 = vunpack.c.l.s4 1934713408
      %v2715 = vunpack.c.0.s8 %v2714
      %v2716 = vperm.slane %v2708, %v2715
      %v2717 = vrot.slane %v2706, 4
      %v2718 = vsel %vm1034, 0.0, %v2717
      %v2720 = vunpack.c.l.s4 1934713408
      %v2721 = vunpack.c.0.s8 %v2720
      %v2722 = vperm.slane %v2706, %v2721
      %v2724 = vunpack.c.l.s4 1934713408
      %v2725 = vunpack.c.0.s8 %v2724
      %v2726 = vperm.slane %v2718, %v2725
      %v2727 = vrot.slane %v2712, 4
      %v2728 = vsel %vm1034, 0.0, %v2727
      %v2729 = vrot.slane %v2716, 4
      %v2730 = vsel %vm1034, 0.0, %v2729
      %v2731 = vrot.slane %v2722, 4
      %v2732 = vsel %vm1034, 0.0, %v2731
      %v2733 = vrot.slane %v2726, 4
      %v2734 = vsel %vm1034, 0.0, %v2733
      %v2735 = vrot.slane %v2292, 4
      %v2736 = vsel %vm1034, 0.0, %v2735
      %v2738 = vunpack.c.l.s4 1983009808
      %v2739 = vunpack.c.0.s8 %v2738
      %v2740 = vperm.slane %v2292, %v2739
      %v2742 = vunpack.c.l.s4 1983009808
      %v2743 = vunpack.c.0.s8 %v2742
      %v2744 = vperm.slane %v2736, %v2743
      %v2745 = vrot.slane %v2740, 4
      %v2746 = vsel %vm1034, 0.0, %v2745
      %v2748 = vunpack.c.l.s4 1934713408
      %v2749 = vunpack.c.0.s8 %v2748
      %v2750 = vperm.slane %v2740, %v2749
      %v2752 = vunpack.c.l.s4 1934713408
      %v2753 = vunpack.c.0.s8 %v2752
      %v2754 = vperm.slane %v2746, %v2753
      %v2755 = vrot.slane %v2744, 4
      %v2756 = vsel %vm1034, 0.0, %v2755
      %v2758 = vunpack.c.l.s4 1934713408
      %v2759 = vunpack.c.0.s8 %v2758
      %v2760 = vperm.slane %v2744, %v2759
      %v2762 = vunpack.c.l.s4 1934713408
      %v2763 = vunpack.c.0.s8 %v2762
      %v2764 = vperm.slane %v2756, %v2763
      %v2765 = vrot.slane %v2750, 4
      %v2766 = vsel %vm1034, 0.0, %v2765
      %v2767 = vrot.slane %v2754, 4
      %v2768 = vsel %vm1034, 0.0, %v2767
      %v2769 = vrot.slane %v2760, 4
      %v2770 = vsel %vm1034, 0.0, %v2769
      %v2771 = vrot.slane %v2764, 4
      %v2772 = vsel %vm1034, 0.0, %v2771
      %v2773 = vrot.slane %v2294, 4
      %v2774 = vsel %vm1034, 0.0, %v2773
      %v2776 = vunpack.c.l.s4 1983009808
      %v2777 = vunpack.c.0.s8 %v2776
      %v2778 = vperm.slane %v2294, %v2777
      %v2780 = vunpack.c.l.s4 1983009808
      %v2781 = vunpack.c.0.s8 %v2780
      %v2782 = vperm.slane %v2774, %v2781
      %v2783 = vrot.slane %v2778, 4
      %v2784 = vsel %vm1034, 0.0, %v2783
      %v2786 = vunpack.c.l.s4 1934713408
      %v2787 = vunpack.c.0.s8 %v2786
      %v2788 = vperm.slane %v2778, %v2787
      %v2790 = vunpack.c.l.s4 1934713408
      %v2791 = vunpack.c.0.s8 %v2790
      %v2792 = vperm.slane %v2784, %v2791
      %v2793 = vrot.slane %v2782, 4
      %v2794 = vsel %vm1034, 0.0, %v2793
      %v2796 = vunpack.c.l.s4 1934713408
      %v2797 = vunpack.c.0.s8 %v2796
      %v2798 = vperm.slane %v2782, %v2797
      %v2800 = vunpack.c.l.s4 1934713408
      %v2801 = vunpack.c.0.s8 %v2800
      %v2802 = vperm.slane %v2794, %v2801
      %v2803 = vrot.slane %v2788, 4
      %v2804 = vsel %vm1034, 0.0, %v2803
      %v2805 = vrot.slane %v2792, 4
      %v2806 = vsel %vm1034, 0.0, %v2805
      %v2807 = vrot.slane %v2798, 4
      %v2808 = vsel %vm1034, 0.0, %v2807
      %v2809 = vrot.slane %v2802, 4
      %v2810 = vsel %vm1034, 0.0, %v2809
      %v2811 = vrot.slane %v2296, 4
      %v2812 = vsel %vm1034, 0.0, %v2811
      %v2814 = vunpack.c.l.s4 1983009808
      %v2815 = vunpack.c.0.s8 %v2814
      %v2816 = vperm.slane %v2296, %v2815
      %v2818 = vunpack.c.l.s4 1983009808
      %v2819 = vunpack.c.0.s8 %v2818
      %v2820 = vperm.slane %v2812, %v2819
      %v2821 = vrot.slane %v2816, 4
      %v2822 = vsel %vm1034, 0.0, %v2821
      %v2824 = vunpack.c.l.s4 1934713408
      %v2825 = vunpack.c.0.s8 %v2824
      %v2826 = vperm.slane %v2816, %v2825
      %v2828 = vunpack.c.l.s4 1934713408
      %v2829 = vunpack.c.0.s8 %v2828
      %v2830 = vperm.slane %v2822, %v2829
      %v2831 = vrot.slane %v2820, 4
      %v2832 = vsel %vm1034, 0.0, %v2831
      %v2834 = vunpack.c.l.s4 1934713408
      %v2835 = vunpack.c.0.s8 %v2834
      %v2836 = vperm.slane %v2820, %v2835
      %v2838 = vunpack.c.l.s4 1934713408
      %v2839 = vunpack.c.0.s8 %v2838
      %v2840 = vperm.slane %v2832, %v2839
      %v2841 = vrot.slane %v2826, 4
      %v2842 = vsel %vm1034, 0.0, %v2841
      %v2843 = vrot.slane %v2830, 4
      %v2844 = vsel %vm1034, 0.0, %v2843
      %v2845 = vrot.slane %v2836, 4
      %v2846 = vsel %vm1034, 0.0, %v2845
      %v2847 = vrot.slane %v2840, 4
      %v2848 = vsel %vm1034, 0.0, %v2847
      %v2849 = vrot.slane %v2298, 4
      %v2850 = vsel %vm1034, 0.0, %v2849
      %v2852 = vunpack.c.l.s4 1983009808
      %v2853 = vunpack.c.0.s8 %v2852
      %v2854 = vperm.slane %v2298, %v2853
      %v2856 = vunpack.c.l.s4 1983009808
      %v2857 = vunpack.c.0.s8 %v2856
      %v2858 = vperm.slane %v2850, %v2857
      %v2859 = vrot.slane %v2854, 4
      %v2860 = vsel %vm1034, 0.0, %v2859
      %v2862 = vunpack.c.l.s4 1934713408
      %v2863 = vunpack.c.0.s8 %v2862
      %v2864 = vperm.slane %v2854, %v2863
      %v2866 = vunpack.c.l.s4 1934713408
      %v2867 = vunpack.c.0.s8 %v2866
      %v2868 = vperm.slane %v2860, %v2867
      %v2869 = vrot.slane %v2858, 4
      %v2870 = vsel %vm1034, 0.0, %v2869
      %v2872 = vunpack.c.l.s4 1934713408
      %v2873 = vunpack.c.0.s8 %v2872
      %v2874 = vperm.slane %v2858, %v2873
      %v2876 = vunpack.c.l.s4 1934713408
      %v2877 = vunpack.c.0.s8 %v2876
      %v2878 = vperm.slane %v2870, %v2877
      %v2879 = vrot.slane %v2864, 4
      %v2880 = vsel %vm1034, 0.0, %v2879
      %v2881 = vrot.slane %v2868, 4
      %v2882 = vsel %vm1034, 0.0, %v2881
      %v2883 = vrot.slane %v2874, 4
      %v2884 = vsel %vm1034, 0.0, %v2883
      %v2885 = vrot.slane %v2878, 4
      %v2886 = vsel %vm1034, 0.0, %v2885
      %v2887 = vrot.slane %v2300, 4
      %v2888 = vsel %vm1034, 0.0, %v2887
      %v2890 = vunpack.c.l.s4 1983009808
      %v2891 = vunpack.c.0.s8 %v2890
      %v2892 = vperm.slane %v2300, %v2891
      %v2894 = vunpack.c.l.s4 1983009808
      %v2895 = vunpack.c.0.s8 %v2894
      %v2896 = vperm.slane %v2888, %v2895
      %v2897 = vrot.slane %v2892, 4
      %v2898 = vsel %vm1034, 0.0, %v2897
      %v2900 = vunpack.c.l.s4 1934713408
      %v2901 = vunpack.c.0.s8 %v2900
      %v2902 = vperm.slane %v2892, %v2901
      %v2904 = vunpack.c.l.s4 1934713408
      %v2905 = vunpack.c.0.s8 %v2904
      %v2906 = vperm.slane %v2898, %v2905
      %v2907 = vrot.slane %v2896, 4
      %v2908 = vsel %vm1034, 0.0, %v2907
      %v2910 = vunpack.c.l.s4 1934713408
      %v2911 = vunpack.c.0.s8 %v2910
      %v2912 = vperm.slane %v2896, %v2911
      %v2914 = vunpack.c.l.s4 1934713408
      %v2915 = vunpack.c.0.s8 %v2914
      %v2916 = vperm.slane %v2908, %v2915
      %v2917 = vrot.slane %v2902, 4
      %v2918 = vsel %vm1034, 0.0, %v2917
      %v2919 = vrot.slane %v2906, 4
      %v2920 = vsel %vm1034, 0.0, %v2919
      %v2921 = vrot.slane %v2912, 4
      %v2922 = vsel %vm1034, 0.0, %v2921
      %v2923 = vrot.slane %v2916, 4
      %v2924 = vsel %vm1034, 0.0, %v2923
      %2933 = vrot.lane.b32.xlu0 %v2348, 8
      %v2934 = vpop.permute.xlu0 %2933
      %2935 = vrot.lane.b32.xlu0 %v2424, 8
      %v2936 = vpop.permute.xlu0 %2935
      %2937 = vrot.lane.b32.xlu0 %v2500, 8
      %v2938 = vpop.permute.xlu0 %2937
      %2939 = vrot.lane.b32.xlu0 %v2576, 8
      %v2940 = vpop.permute.xlu0 %2939
      %2941 = vrot.lane.b32.xlu0 %v2652, 8
      %v2942 = vpop.permute.xlu0 %2941
      %2943 = vrot.lane.b32.xlu0 %v2728, 8
      %v2944 = vpop.permute.xlu0 %2943
      %2945 = vrot.lane.b32.xlu0 %v2804, 8
      %v2946 = vpop.permute.xlu0 %2945
      %2947 = vrot.lane.b32.xlu0 %v2880, 8
      %v2948 = vpop.permute.xlu0 %2947
      %2965 = vrot.lane.b32.xlu0 %v2336, 16
      %v2966 = vpop.permute.xlu0 %2965
      %2967 = vrot.lane.b32.xlu0 %v2412, 16
      %v2968 = vpop.permute.xlu0 %2967
      %2969 = vrot.lane.b32.xlu0 %v2488, 16
      %v2970 = vpop.permute.xlu0 %2969
      %2971 = vrot.lane.b32.xlu0 %v2564, 16
      %v2972 = vpop.permute.xlu0 %2971
      %2973 = vrot.lane.b32.xlu0 %v2640, 16
      %v2974 = vpop.permute.xlu0 %2973
      %2975 = vrot.lane.b32.xlu0 %v2716, 16
      %v2976 = vpop.permute.xlu0 %2975
      %2977 = vrot.lane.b32.xlu0 %v2792, 16
      %v2978 = vpop.permute.xlu0 %2977
      %2979 = vrot.lane.b32.xlu0 %v2868, 16
      %v2980 = vpop.permute.xlu0 %2979
      %2997 = vrot.lane.b32.xlu0 %v2350, 24
      %v2998 = vpop.permute.xlu0 %2997
      %2999 = vrot.lane.b32.xlu0 %v2426, 24
      %v3000 = vpop.permute.xlu0 %2999
      %3001 = vrot.lane.b32.xlu0 %v2502, 24
      %v3002 = vpop.permute.xlu0 %3001
      %3003 = vrot.lane.b32.xlu0 %v2578, 24
      %v3004 = vpop.permute.xlu0 %3003
      %3005 = vrot.lane.b32.xlu0 %v2654, 24
      %v3006 = vpop.permute.xlu0 %3005
      %3007 = vrot.lane.b32.xlu0 %v2730, 24
      %v3008 = vpop.permute.xlu0 %3007
      %3009 = vrot.lane.b32.xlu0 %v2806, 24
      %v3010 = vpop.permute.xlu0 %3009
      %3011 = vrot.lane.b32.xlu0 %v2882, 24
      %v3012 = vpop.permute.xlu0 %3011
      %3029 = vrot.lane.b32.xlu0 %v2342, 32
      %v3030 = vpop.permute.xlu0 %3029
      %3031 = vrot.lane.b32.xlu0 %v2418, 32
      %v3032 = vpop.permute.xlu0 %3031
      %3033 = vrot.lane.b32.xlu0 %v2494, 32
      %v3034 = vpop.permute.xlu0 %3033
      %3035 = vrot.lane.b32.xlu0 %v2570, 32
      %v3036 = vpop.permute.xlu0 %3035
      %3037 = vrot.lane.b32.xlu0 %v2646, 32
      %v3038 = vpop.permute.xlu0 %3037
      %3039 = vrot.lane.b32.xlu0 %v2722, 32
      %v3040 = vpop.permute.xlu0 %3039
      %3041 = vrot.lane.b32.xlu0 %v2798, 32
      %v3042 = vpop.permute.xlu0 %3041
      %3043 = vrot.lane.b32.xlu0 %v2874, 32
      %v3044 = vpop.permute.xlu0 %3043
      %3061 = vrot.lane.b32.xlu0 %v2352, 40
      %v3062 = vpop.permute.xlu0 %3061
      %3063 = vrot.lane.b32.xlu0 %v2428, 40
      %v3064 = vpop.permute.xlu0 %3063
      %3065 = vrot.lane.b32.xlu0 %v2504, 40
      %v3066 = vpop.permute.xlu0 %3065
      %3067 = vrot.lane.b32.xlu0 %v2580, 40
      %v3068 = vpop.permute.xlu0 %3067
      %3069 = vrot.lane.b32.xlu0 %v2656, 40
      %v3070 = vpop.permute.xlu0 %3069
      %3071 = vrot.lane.b32.xlu0 %v2732, 40
      %v3072 = vpop.permute.xlu0 %3071
      %3073 = vrot.lane.b32.xlu0 %v2808, 40
      %v3074 = vpop.permute.xlu0 %3073
      %3075 = vrot.lane.b32.xlu0 %v2884, 40
      %v3076 = vpop.permute.xlu0 %3075
      %3093 = vrot.lane.b32.xlu0 %v2346, 48
      %v3094 = vpop.permute.xlu0 %3093
      %3095 = vrot.lane.b32.xlu0 %v2422, 48
      %v3096 = vpop.permute.xlu0 %3095
      %3097 = vrot.lane.b32.xlu0 %v2498, 48
      %v3098 = vpop.permute.xlu0 %3097
      %3099 = vrot.lane.b32.xlu0 %v2574, 48
      %v3100 = vpop.permute.xlu0 %3099
      %3101 = vrot.lane.b32.xlu0 %v2650, 48
      %v3102 = vpop.permute.xlu0 %3101
      %3103 = vrot.lane.b32.xlu0 %v2726, 48
      %v3104 = vpop.permute.xlu0 %3103
      %3105 = vrot.lane.b32.xlu0 %v2802, 48
      %v3106 = vpop.permute.xlu0 %3105
      %3107 = vrot.lane.b32.xlu0 %v2878, 48
      %v3108 = vpop.permute.xlu0 %3107
      %3125 = vrot.lane.b32.xlu0 %v2354, 56
      %v3126 = vpop.permute.xlu0 %3125
      %3127 = vrot.lane.b32.xlu0 %v2430, 56
      %v3128 = vpop.permute.xlu0 %3127
      %3129 = vrot.lane.b32.xlu0 %v2506, 56
      %v3130 = vpop.permute.xlu0 %3129
      %3131 = vrot.lane.b32.xlu0 %v2582, 56
      %v3132 = vpop.permute.xlu0 %3131
      %3133 = vrot.lane.b32.xlu0 %v2658, 56
      %v3134 = vpop.permute.xlu0 %3133
      %3135 = vrot.lane.b32.xlu0 %v2734, 56
      %v3136 = vpop.permute.xlu0 %3135
      %3137 = vrot.lane.b32.xlu0 %v2810, 56
      %v3138 = vpop.permute.xlu0 %3137
      %3139 = vrot.lane.b32.xlu0 %v2886, 56
      %v3140 = vpop.permute.xlu0 %3139
      %3157 = vrot.lane.b32.xlu0 %v2370, 64
      %v3158 = vpop.permute.xlu0 %3157
      %3159 = vrot.lane.b32.xlu0 %v2446, 64
      %v3160 = vpop.permute.xlu0 %3159
      %3161 = vrot.lane.b32.xlu0 %v2522, 64
      %v3162 = vpop.permute.xlu0 %3161
      %3163 = vrot.lane.b32.xlu0 %v2598, 64
      %v3164 = vpop.permute.xlu0 %3163
      %3165 = vrot.lane.b32.xlu0 %v2674, 64
      %v3166 = vpop.permute.xlu0 %3165
      %3167 = vrot.lane.b32.xlu0 %v2750, 64
      %v3168 = vpop.permute.xlu0 %3167
      %3169 = vrot.lane.b32.xlu0 %v2826, 64
      %v3170 = vpop.permute.xlu0 %3169
      %3171 = vrot.lane.b32.xlu0 %v2902, 64
      %v3172 = vpop.permute.xlu0 %3171
      %3189 = vrot.lane.b32.xlu0 %v2386, 72
      %v3190 = vpop.permute.xlu0 %3189
      %3191 = vrot.lane.b32.xlu0 %v2462, 72
      %v3192 = vpop.permute.xlu0 %3191
      %3193 = vrot.lane.b32.xlu0 %v2538, 72
      %v3194 = vpop.permute.xlu0 %3193
      %3195 = vrot.lane.b32.xlu0 %v2614, 72
      %v3196 = vpop.permute.xlu0 %3195
      %3197 = vrot.lane.b32.xlu0 %v2690, 72
      %v3198 = vpop.permute.xlu0 %3197
      %3199 = vrot.lane.b32.xlu0 %v2766, 72
      %v3200 = vpop.permute.xlu0 %3199
      %3201 = vrot.lane.b32.xlu0 %v2842, 72
      %v3202 = vpop.permute.xlu0 %3201
      %3203 = vrot.lane.b32.xlu0 %v2918, 72
      %v3204 = vpop.permute.xlu0 %3203
      %3221 = vrot.lane.b32.xlu0 %v2374, 80
      %v3222 = vpop.permute.xlu0 %3221
      %3223 = vrot.lane.b32.xlu0 %v2450, 80
      %v3224 = vpop.permute.xlu0 %3223
      %3225 = vrot.lane.b32.xlu0 %v2526, 80
      %v3226 = vpop.permute.xlu0 %3225
      %3227 = vrot.lane.b32.xlu0 %v2602, 80
      %v3228 = vpop.permute.xlu0 %3227
      %3229 = vrot.lane.b32.xlu0 %v2678, 80
      %v3230 = vpop.permute.xlu0 %3229
      %3231 = vrot.lane.b32.xlu0 %v2754, 80
      %v3232 = vpop.permute.xlu0 %3231
      %3233 = vrot.lane.b32.xlu0 %v2830, 80
      %v3234 = vpop.permute.xlu0 %3233
      %3235 = vrot.lane.b32.xlu0 %v2906, 80
      %v3236 = vpop.permute.xlu0 %3235
      %3253 = vrot.lane.b32.xlu0 %v2388, 88
      %v3254 = vpop.permute.xlu0 %3253
      %3255 = vrot.lane.b32.xlu0 %v2464, 88
      %v3256 = vpop.permute.xlu0 %3255
      %3257 = vrot.lane.b32.xlu0 %v2540, 88
      %v3258 = vpop.permute.xlu0 %3257
      %3259 = vrot.lane.b32.xlu0 %v2616, 88
      %v3260 = vpop.permute.xlu0 %3259
      %3261 = vrot.lane.b32.xlu0 %v2692, 88
      %v3262 = vpop.permute.xlu0 %3261
      %3263 = vrot.lane.b32.xlu0 %v2768, 88
      %v3264 = vpop.permute.xlu0 %3263
      %3265 = vrot.lane.b32.xlu0 %v2844, 88
      %v3266 = vpop.permute.xlu0 %3265
      %3267 = vrot.lane.b32.xlu0 %v2920, 88
      %v3268 = vpop.permute.xlu0 %3267
      %3285 = vrot.lane.b32.xlu0 %v2380, 96
      %v3286 = vpop.permute.xlu0 %3285
      %3287 = vrot.lane.b32.xlu0 %v2456, 96
      %v3288 = vpop.permute.xlu0 %3287
      %3289 = vrot.lane.b32.xlu0 %v2532, 96
      %v3290 = vpop.permute.xlu0 %3289
      %3291 = vrot.lane.b32.xlu0 %v2608, 96
      %v3292 = vpop.permute.xlu0 %3291
      %3293 = vrot.lane.b32.xlu0 %v2684, 96
      %v3294 = vpop.permute.xlu0 %3293
      %3295 = vrot.lane.b32.xlu0 %v2760, 96
      %v3296 = vpop.permute.xlu0 %3295
      %3297 = vrot.lane.b32.xlu0 %v2836, 96
      %v3298 = vpop.permute.xlu0 %3297
      %3299 = vrot.lane.b32.xlu0 %v2912, 96
      %v3300 = vpop.permute.xlu0 %3299
      %3317 = vrot.lane.b32.xlu0 %v2390, 104
      %v3318 = vpop.permute.xlu0 %3317
      %3319 = vrot.lane.b32.xlu0 %v2466, 104
      %v3320 = vpop.permute.xlu0 %3319
      %3321 = vrot.lane.b32.xlu0 %v2542, 104
      %v3322 = vpop.permute.xlu0 %3321
      %3323 = vrot.lane.b32.xlu0 %v2618, 104
      %v3324 = vpop.permute.xlu0 %3323
      %3325 = vrot.lane.b32.xlu0 %v2694, 104
      %v3326 = vpop.permute.xlu0 %3325
      %3327 = vrot.lane.b32.xlu0 %v2770, 104
      %v3328 = vpop.permute.xlu0 %3327
      %3329 = vrot.lane.b32.xlu0 %v2846, 104
      %v3330 = vpop.permute.xlu0 %3329
      %3331 = vrot.lane.b32.xlu0 %v2922, 104
      %v3332 = vpop.permute.xlu0 %3331
      %3349 = vrot.lane.b32.xlu0 %v2384, 112
      %v3350 = vpop.permute.xlu0 %3349
      %3351 = vrot.lane.b32.xlu0 %v2460, 112
      %v3352 = vpop.permute.xlu0 %3351
      %3353 = vrot.lane.b32.xlu0 %v2536, 112
      %v3354 = vpop.permute.xlu0 %3353
      %3355 = vrot.lane.b32.xlu0 %v2612, 112
      %v3356 = vpop.permute.xlu0 %3355
      %3357 = vrot.lane.b32.xlu0 %v2688, 112
      %v3358 = vpop.permute.xlu0 %3357
      %3359 = vrot.lane.b32.xlu0 %v2764, 112
      %v3360 = vpop.permute.xlu0 %3359
      %3361 = vrot.lane.b32.xlu0 %v2840, 112
      %v3362 = vpop.permute.xlu0 %3361
      %3363 = vrot.lane.b32.xlu0 %v2916, 112
      %v3364 = vpop.permute.xlu0 %3363
      %3381 = vrot.lane.b32.xlu0 %v2392, 120
      %v3382 = vpop.permute.xlu0 %3381
      %3383 = vrot.lane.b32.xlu0 %v2468, 120
      %v3384 = vpop.permute.xlu0 %3383
      %3385 = vrot.lane.b32.xlu0 %v2544, 120
      %v3386 = vpop.permute.xlu0 %3385
      %3387 = vrot.lane.b32.xlu0 %v2620, 120
      %v3388 = vpop.permute.xlu0 %3387
      %3389 = vrot.lane.b32.xlu0 %v2696, 120
      %v3390 = vpop.permute.xlu0 %3389
      %3391 = vrot.lane.b32.xlu0 %v2772, 120
      %v3392 = vpop.permute.xlu0 %3391
      %3393 = vrot.lane.b32.xlu0 %v2848, 120
      %v3394 = vpop.permute.xlu0 %3393
      %3395 = vrot.lane.b32.xlu0 %v2924, 120
      %v3396 = vpop.permute.xlu0 %3395
      %v3405 = vsel %vm771, %v2332, %v2934
      %v3406 = vsel %vm771, %v2408, %v2936
      %v3407 = vsel %vm771, %v2484, %v2938
      %v3408 = vsel %vm771, %v2560, %v2940
      %v3409 = vsel %vm771, %v2636, %v2942
      %v3410 = vsel %vm771, %v2712, %v2944
      %v3411 = vsel %vm771, %v2788, %v2946
      %v3412 = vsel %vm771, %v2864, %v2948
      %v3413 = vsel %vm805, %v3405, %v2966
      %v3414 = vsel %vm805, %v3406, %v2968
      %v3415 = vsel %vm805, %v3407, %v2970
      %v3416 = vsel %vm805, %v3408, %v2972
      %v3417 = vsel %vm805, %v3409, %v2974
      %v3418 = vsel %vm805, %v3410, %v2976
      %v3419 = vsel %vm805, %v3411, %v2978
      %v3420 = vsel %vm805, %v3412, %v2980
      %v3421 = vsel %vm839, %v3413, %v2998
      %v3422 = vsel %vm839, %v3414, %v3000
      %v3423 = vsel %vm839, %v3415, %v3002
      %v3424 = vsel %vm839, %v3416, %v3004
      %v3425 = vsel %vm839, %v3417, %v3006
      %v3426 = vsel %vm839, %v3418, %v3008
      %v3427 = vsel %vm839, %v3419, %v3010
      %v3428 = vsel %vm839, %v3420, %v3012
      %v3429 = vsel %vm873, %v3421, %v3030
      %v3430 = vsel %vm873, %v3422, %v3032
      %v3431 = vsel %vm873, %v3423, %v3034
      %v3432 = vsel %vm873, %v3424, %v3036
      %v3433 = vsel %vm873, %v3425, %v3038
      %v3434 = vsel %vm873, %v3426, %v3040
      %v3435 = vsel %vm873, %v3427, %v3042
      %v3436 = vsel %vm873, %v3428, %v3044
      %v3437 = vsel %vm2154, %v3429, %v3062
      %v3438 = vsel %vm2154, %v3430, %v3064
      %v3439 = vsel %vm2154, %v3431, %v3066
      %v3440 = vsel %vm2154, %v3432, %v3068
      %v3441 = vsel %vm2154, %v3433, %v3070
      %v3442 = vsel %vm2154, %v3434, %v3072
      %v3443 = vsel %vm2154, %v3435, %v3074
      %v3444 = vsel %vm2154, %v3436, %v3076
      %v3445 = vsel %vm2163, %v3437, %v3094
      %v3446 = vsel %vm2163, %v3438, %v3096
      %v3447 = vsel %vm2163, %v3439, %v3098
      %v3448 = vsel %vm2163, %v3440, %v3100
      %v3449 = vsel %vm2163, %v3441, %v3102
      %v3450 = vsel %vm2163, %v3442, %v3104
      %v3451 = vsel %vm2163, %v3443, %v3106
      %v3452 = vsel %vm2163, %v3444, %v3108
      %v3453 = vsel %vm2172, %v3445, %v3126
      %v3454 = vsel %vm2172, %v3446, %v3128
      %v3455 = vsel %vm2172, %v3447, %v3130
      %v3456 = vsel %vm2172, %v3448, %v3132
      %v3457 = vsel %vm2172, %v3449, %v3134
      %v3458 = vsel %vm2172, %v3450, %v3136
      %v3459 = vsel %vm2172, %v3451, %v3138
      %v3460 = vsel %vm2172, %v3452, %v3140
      %v3461 = vsel %vm2181, %v3453, %v3158
      %v3462 = vsel %vm2181, %v3454, %v3160
      %v3463 = vsel %vm2181, %v3455, %v3162
      %v3464 = vsel %vm2181, %v3456, %v3164
      %v3465 = vsel %vm2181, %v3457, %v3166
      %v3466 = vsel %vm2181, %v3458, %v3168
      %v3467 = vsel %vm2181, %v3459, %v3170
      %v3468 = vsel %vm2181, %v3460, %v3172
      %v3469 = vsel %vm2190, %v3461, %v3190
      %v3470 = vsel %vm2190, %v3462, %v3192
      %v3471 = vsel %vm2190, %v3463, %v3194
      %v3472 = vsel %vm2190, %v3464, %v3196
      %v3473 = vsel %vm2190, %v3465, %v3198
      %v3474 = vsel %vm2190, %v3466, %v3200
      %v3475 = vsel %vm2190, %v3467, %v3202
      %v3476 = vsel %vm2190, %v3468, %v3204
      %v3477 = vsel %vm2199, %v3469, %v3222
      %v3478 = vsel %vm2199, %v3470, %v3224
      %v3479 = vsel %vm2199, %v3471, %v3226
      %v3480 = vsel %vm2199, %v3472, %v3228
      %v3481 = vsel %vm2199, %v3473, %v3230
      %v3482 = vsel %vm2199, %v3474, %v3232
      %v3483 = vsel %vm2199, %v3475, %v3234
      %v3484 = vsel %vm2199, %v3476, %v3236
      %v3485 = vsel %vm2208, %v3477, %v3254
      %v3486 = vsel %vm2208, %v3478, %v3256
      %v3487 = vsel %vm2208, %v3479, %v3258
      %v3488 = vsel %vm2208, %v3480, %v3260
      %v3489 = vsel %vm2208, %v3481, %v3262
      %v3490 = vsel %vm2208, %v3482, %v3264
      %v3491 = vsel %vm2208, %v3483, %v3266
      %v3492 = vsel %vm2208, %v3484, %v3268
      %v3493 = vsel %vm2217, %v3485, %v3286
      %v3494 = vsel %vm2217, %v3486, %v3288
      %v3495 = vsel %vm2217, %v3487, %v3290
      %v3496 = vsel %vm2217, %v3488, %v3292
      %v3497 = vsel %vm2217, %v3489, %v3294
      %v3498 = vsel %vm2217, %v3490, %v3296
      %v3499 = vsel %vm2217, %v3491, %v3298
      %v3500 = vsel %vm2217, %v3492, %v3300
      %v3501 = vsel %vm2226, %v3493, %v3318
      %v3502 = vsel %vm2226, %v3494, %v3320
      %v3503 = vsel %vm2226, %v3495, %v3322
      %v3504 = vsel %vm2226, %v3496, %v3324
      %v3505 = vsel %vm2226, %v3497, %v3326
      %v3506 = vsel %vm2226, %v3498, %v3328
      %v3507 = vsel %vm2226, %v3499, %v3330
      %v3508 = vsel %vm2226, %v3500, %v3332
      %v3509 = vsel %vm2235, %v3501, %v3350
      %v3510 = vsel %vm2235, %v3502, %v3352
      %v3511 = vsel %vm2235, %v3503, %v3354
      %v3512 = vsel %vm2235, %v3504, %v3356
      %v3513 = vsel %vm2235, %v3505, %v3358
      %v3514 = vsel %vm2235, %v3506, %v3360
      %v3515 = vsel %vm2235, %v3507, %v3362
      %v3516 = vsel %vm2235, %v3508, %v3364
      %v3517 = vsel %vm2244, %v3509, %v3382
      %v3518 = vsel %vm2244, %v3510, %v3384
      %v3519 = vsel %vm2244, %v3511, %v3386
      %v3520 = vsel %vm2244, %v3512, %v3388
      %v3521 = vsel %vm2244, %v3513, %v3390
      %v3522 = vsel %vm2244, %v3514, %v3392
      %v3523 = vsel %vm2244, %v3515, %v3394
      %v3524 = vsel %vm2244, %v3516, %v3396
      %v3533 = vrot.slane %v3517, 7
      %v3534 = vrot.slane %v3518, 7
      %v3535 = vrot.slane %v3519, 7
      %v3536 = vrot.slane %v3520, 7
      %v3537 = vrot.slane %v3521, 7
      %v3538 = vrot.slane %v3522, 7
      %v3539 = vrot.slane %v3523, 7
      %v3540 = vrot.slane %v3524, 7
      %vm3549 = vcmask 1040384
      %v3550 = vsel %vm3549, %v2245, %v3533
      %v3551 = vsel %vm3549, %v2246, %v3534
      %v3552 = vsel %vm3549, %v2247, %v3535
      %v3553 = vsel %vm3549, %v2248, %v3536
      %v3554 = vsel %vm3549, %v2249, %v3537
      %v3555 = vsel %vm3549, %v2250, %v3538
      %v3556 = vsel %vm3549, %v2251, %v3539
      %v3557 = vsel %vm3549, %v2252, %v3540
      %3566 = vst [vmem:[#allocation1] ss:$4 sm:$0xff] %v3550
      %s3567 = scalar_lea.vmem [#allocation1], 1
      %3568 = vst [vmem:[%s3567] ss:$4 sm:$0xff] %v3551
      %s3569 = scalar_lea.vmem [#allocation1], 2
      %3570 = vst [vmem:[%s3569] ss:$4 sm:$0xff] %v3552
      %s3571 = scalar_lea.vmem [#allocation1], 3
      %3572 = vst [vmem:[%s3571] ss:$4 sm:$0xff] %v3553
      %s3573 = scalar_lea.vmem [#allocation1], 32
      %3574 = vst [vmem:[%s3573] ss:$4 sm:$0xff] %v3554
      %s3575 = scalar_lea.vmem [#allocation1], 33
      %3576 = vst [vmem:[%s3575] ss:$4 sm:$0xff] %v3555
      %s3577 = scalar_lea.vmem [#allocation1], 34
      %3578 = vst [vmem:[%s3577] ss:$4 sm:$0xff] %v3556
      %s3579 = scalar_lea.vmem [#allocation1], 35
      %3580 = vst [vmem:[%s3579] ss:$4 sm:$0xff] %v3557
      %v3581 = vld.sshfl [vmem:[#allocation1] sm:$0xff pattern:$0x73625140]
      %v3582 = vld.sshfl [vmem:[#allocation1 + $0x20] sm:$0xff pattern:$0x73625140]
      %3585 = vst [vmem:[%s206] sm:$0xff] %v3581
      %3586 = vst [vmem:[%s206 + $0x8] sm:$0xff] %v3582
      %s3587 = smul.u32 2, %s19
      %p3588 = scmp.lt.s32.totalorder %s18, 1
      %s3589 = scalar_select %p3588, %s18, 1
      %p3590 = scmp.lt.s32.totalorder %s3587, 3
      %s3591 = scalar_select %p3590, %s3587, 3
      %s3592 = smul.addr %s3589, 4
      %s3593 = sadd.s32 %s3591, %s3592
      %s3594 = smul.addr %s3593, 8
      %s3595 = scalar_lea.vmem %s3, %s3594
      // Predicated region
      $region33: #{conv3x3_relu_pixel_shuffle.1} parent=31 // pred_check
        %p3596 = pneg %p116
      $region34: #{conv3x3_relu_pixel_shuffle.1} parent=31 // pred_check_branch
        %3598 = sbr.rel (%p3596) target = $region36
      $region35: #{conv3x3_relu_pixel_shuffle.1} parent=31 // pred_region
        %s3599 = smul.u32 2, %s19
      $region36: #{conv3x3_relu_pixel_shuffle.1} parent=31 // pred_fallthru
        _
    $region32: #{conv3x3_relu_pixel_shuffle.1} parent=5 // pred_fallthru
      _
    %p3600 = scmp.le.s32.totalorder 2, %s9
    // Predicated region
    $region37: #{conv3x3_relu_pixel_shuffle.1} parent=5 // pred_check
      %p3601 = pneg %p3600
    $region38: #{conv3x3_relu_pixel_shuffle.1} parent=5 // pred_check_branch
      %3603 = sbr.rel (%p3601) target = $region40
    $region39: #{conv3x3_relu_pixel_shuffle.1} parent=5 // pred_region
      %s3604 = ssub.s32 %s9, 2
      // Predicated region
      $region41: #{conv3x3_relu_pixel_shuffle.1} parent=39 // pred_check
        %p3605 = pneg %p122
      $region42: #{conv3x3_relu_pixel_shuffle.1} parent=39 // pred_check_branch
        %3607 = sbr.rel (%p3605) target = $region44
      $region43: #{conv3x3_relu_pixel_shuffle.1} parent=39 // pred_region
        %s3608 = smul.u32 2, %s21
        %p3609 = scmp.lt.s32.totalorder %s20, 1
        %s3610 = scalar_select %p3609, %s20, 1
        %p3611 = scmp.lt.s32.totalorder %s3608, 3
        %s3612 = scalar_select %p3611, %s3608, 3
        %s3613 = smul.addr %s3610, 4
        %s3614 = sadd.s32 %s3612, %s3613
        %s3615 = smul.addr %s3614, 8
        %s3616 = scalar_lea.vmem %s3, %s3615
      $region44: #{conv3x3_relu_pixel_shuffle.1} parent=39 // pred_fallthru
        _
    $region40: #{conv3x3_relu_pixel_shuffle.1} parent=5 // pred_fallthru
      _
  $region6: #{conv3x3_relu_pixel_shuffle.1} parent=0 // loop_footer
    %s13 = sadd.s32 1, %s9
  $region7: #{conv3x3_relu_pixel_shuffle.1} parent=0 // loop_footer_branch
    %8 = sbr.rel target = $region3
  $region8: #{conv3x3_relu_pixel_shuffle.1} parent=0 // loop_exit
    _

</llo_original>
